<compile_context>
chip_gen: v7x
topology: tpu7x:2x2x1
jax: 0.10.0
libtpu: 0.0.40
codegen_flags: <defaults>
</compile_context>

<pallas_src>
import functools

import jax
import jax.numpy as jnp
from jax import lax
from jax.experimental import pallas as pl
from jax.experimental.pallas import tpu as pltpu


def _round_up(v, m):
    return (v + m - 1) // m * m


def _bam_kernel(x_ref, w1t_ref, b1_ref, alpha_ref, w2t_ref, b2_ref,
                wmask_ref, bsa_ref, o_ref, pad_ref, *, W, P, KS, KPAD):
    # x_ref block: (B_blk, C, H*W)  -- HW on lanes, C on sublanes.
    B, C, HW = x_ref.shape
    f32 = jnp.float32

    # ---------------- reductions (avg over HW, max over C) ------------------
    xb = x_ref[...].astype(f32)
    avg = jnp.mean(xb, axis=2)                       # (B, C)   lane reduce (XLU)
    m_flat = jnp.max(xb, axis=1)                     # (B, HW)  sublane reduce

    # ---------------- channel attention (batched 1x1 convs) -----------------
    h = jnp.dot(avg, w1t_ref[...], preferred_element_type=f32) + b1_ref[...]   # (B, Cr)
    h = jnp.where(h > 0, h, alpha_ref[...] * h)                                # PReLU
    h = jnp.dot(h, w2t_ref[...], preferred_element_type=f32) + b2_ref[...]     # (B, C)
    ca = jax.nn.sigmoid(h)                                                     # (B, C)

    # ---------------- spatial attention: 7x7 conv on the channel-max map ----
    # Flat zero-padded scratch: [0,P) zeros | m_flat (HW) | trailing P zeros.
    # Row (H-direction) padding is handled by the zeros; column wrap-around is
    # handled by the column-validity masks folded into wmask in the wrapper.
    # P is a multiple of 128 so the data region stays lane aligned.
    pad_ref[:, 0:P] = jnp.zeros((B, P), f32)
    pad_ref[:, P:P + HW] = m_flat
    pad_ref[:, P + HW:P + HW + P] = jnp.zeros((B, P), f32)

    acc = jnp.full((B, HW), bsa_ref[0], f32)
    for k in range(KS * KS):                          # 49 static shifted reads
        di = k // KS
        dj = k % KS
        shift = W * (di - KPAD) + (dj - KPAD)
        src = pad_ref[:, P + shift:P + shift + HW]    # (B, HW) shifted view
        acc = acc + wmask_ref[k:k + 1, :] * src       # masked weight row
    sa = jax.nn.sigmoid(acc)                          # (B, HW)

    # ---------------- combine: ca * sa * x -----------------------------------
    # One fused full-tile multiply -> unmasked full-width stores over the whole
    # (B, C, HW) block (previously: C masked single-sublane stores).
    o_ref[...] = (x_ref[...].astype(f32)
                  * sa[:, None, :]
                  * ca[:, :, None]).astype(o_ref.dtype)


def bam_forward(x, w1, b1, alpha, w2, b2, wsa, bsa):
    """x: (N,C,H,W); w1:(Cr,C); b1:(Cr,); alpha:(Cr,); w2:(C,Cr); b2:(C,);
    wsa:(K,K); bsa:(1,).  Returns (N,C,H,W)."""
    N, C, H, W = x.shape
    Cr = w1.shape[0]
    HW = H * W
    KS = wsa.shape[0]
    KPAD = KS // 2

    # ---- lane-dense layout ----
    x_flat = x.reshape(N, C, HW)

    # ---- batch block: largest divisor of N with a modest VMEM footprint ----
    item_bytes = C * HW * x.dtype.itemsize
    cap = max(1, min(N, 8, (1 << 20) // max(item_bytes, 1)))
    B_blk = 1
    for b in range(cap, 0, -1):
        if N % b == 0:
            B_blk = b
            break
    grid = (N // B_blk,)

    # ---- padding width for the flattened conv scratch (lane aligned) ----
    P = _round_up(KPAD * W + KPAD, 128)

    # ---- fold column-validity masks into the 7x7 weights: (KS*KS, HW) ----
    col = jnp.arange(HW, dtype=jnp.int32) % W
    dj = jnp.arange(KS, dtype=jnp.int32)[:, None]
    valid = ((col[None, :] + dj - KPAD) >= 0) & ((col[None, :] + dj - KPAD) < W)   # (KS, HW)
    wmask = (wsa.astype(jnp.float32)[:, :, None]
             * valid[None, :, :].astype(jnp.float32)).reshape(KS * KS, HW)

    # ---- parameter shaping for batched in-kernel matmuls ----
    w1t = w1.T.astype(jnp.float32)            # (C, Cr)
    w2t = w2.T.astype(jnp.float32)            # (Cr, C)
    b1r = b1.reshape(1, Cr).astype(jnp.float32)
    ar = alpha.reshape(1, Cr).astype(jnp.float32)
    b2r = b2.reshape(1, C).astype(jnp.float32)
    bsa1 = bsa.reshape(1).astype(jnp.float32)

    kernel = functools.partial(_bam_kernel, W=W, P=P, KS=KS, KPAD=KPAD)

    out_flat = pl.pallas_call(
        kernel,
        out_shape=jax.ShapeDtypeStruct((N, C, HW), x.dtype),
        grid=grid,
        in_specs=[
            pl.BlockSpec((B_blk, C, HW), lambda i: (i, 0, 0)),    # x (lane-dense)
            pl.BlockSpec((C, Cr), lambda i: (0, 0)),              # conv1 weight^T
            pl.BlockSpec((1, Cr), lambda i: (0, 0)),              # conv1 bias
            pl.BlockSpec((1, Cr), lambda i: (0, 0)),              # PReLU alpha
            pl.BlockSpec((Cr, C), lambda i: (0, 0)),              # conv2 weight^T
            pl.BlockSpec((1, C), lambda i: (0, 0)),               # conv2 bias
            pl.BlockSpec((KS * KS, HW), lambda i: (0, 0)),        # masked 7x7 weights
            pl.BlockSpec(memory_space=pltpu.MemorySpace.SMEM),    # spatial bias scalar
        ],
        out_specs=pl.BlockSpec((B_blk, C, HW), lambda i: (i, 0, 0)),
        scratch_shapes=[pltpu.VMEM((B_blk, HW + 2 * P), jnp.float32)],
        compiler_params=pltpu.CompilerParams(
            dimension_semantics=("parallel",)),
    )(x_flat, w1t, b1r, ar, w2t, b2r, wmask, bsa1)

    return out_flat.reshape(N, C, H, W)


def bam_reference(x, w1, b1, alpha, w2, b2, wsa, bsa):
    """Pure-JAX reference matching the PyTorch forward."""
    avg = jnp.mean(x, axis=(2, 3))                                   # (N, C)
    h = avg @ w1.T + b1                                              # (N, Cr)
    h = jnp.where(h > 0, h, alpha * h)                               # PReLU
    h = h @ w2.T + b2                                                # (N, C)
    ca = jax.nn.sigmoid(h)[:, :, None, None]                         # (N, C, 1, 1)
    m = jnp.max(x, axis=1, keepdims=True)                            # (N, 1, H, W)
    conv = lax.conv_general_dilated(
        m, wsa[None, None, :, :], window_strides=(1, 1),
        padding=((3, 3), (3, 3)),
        dimension_numbers=('NCHW', 'OIHW', 'NCHW')) + bsa[0]
    sa = jax.nn.sigmoid(conv)                                        # (N, 1, H, W)
    return ca * sa * x


if __name__ == "__main__":
    N, C, H, W = 4, 32, 16, 16
    reduction = 16
    Cr = C // reduction

    key = jax.random.PRNGKey(0)
    ks = jax.random.split(key, 7)
    x = jax.random.normal(ks[0], (N, C, H, W), jnp.float32)

    # Synthetic parameters (shapes from the module __init__).
    w1 = jax.random.normal(ks[1], (Cr, C), jnp.float32) * 0.1        # Conv2d(C, Cr, 1)
    b1 = jax.random.normal(ks[2], (Cr,), jnp.float32) * 0.1
    alpha = jnp.full((Cr,), 0.25, jnp.float32)                       # PReLU default init
    w2 = jax.random.normal(ks[3], (C, Cr), jnp.float32) * 0.1        # Conv2d(Cr, C, 1)
    b2 = jax.random.normal(ks[4], (C,), jnp.float32) * 0.1
    wsa = jax.random.normal(ks[5], (7, 7), jnp.float32) * 0.1        # Conv2d(1, 1, 7, pad=3)
    bsa = jax.random.normal(ks[6], (1,), jnp.float32) * 0.1

    out = jax.block_until_ready(bam_forward(x, w1, b1, alpha, w2, b2, wsa, bsa))
    ref = jax.block_until_ready(bam_reference(x, w1, b1, alpha, w2, b2, wsa, bsa))

    assert out.shape == ref.shape and out.dtype == ref.dtype
    assert bool(jnp.allclose(out, ref, atol=1e-3, rtol=1e-3)), "mismatch vs reference"

    print("KERNEL_OK")
</pallas_src>

<mosaic_0001>
module attributes {stable_mosaic.version = 11 : i64} {
  func.func @_bam_kernel(%arg0: i32, %arg1: memref<4x32x256xf32, #tpu.memory_space<vmem>>, %arg2: memref<32x2xf32, #tpu.memory_space<vmem>>, %arg3: memref<1x2xf32, #tpu.memory_space<vmem>>, %arg4: memref<1x2xf32, #tpu.memory_space<vmem>>, %arg5: memref<2x32xf32, #tpu.memory_space<vmem>>, %arg6: memref<1x32xf32, #tpu.memory_space<vmem>>, %arg7: memref<49x256xf32, #tpu.memory_space<vmem>>, %arg8: memref<1xf32, #tpu.memory_space<smem>>, %arg9: memref<4x32x256xf32, #tpu.memory_space<vmem>>, %arg10: memref<4x512xf32, #tpu.memory_space<vmem>>) attributes {dimension_semantics = [#tpu.dimension_semantics<parallel>], iteration_bounds = array<i64: 1>, scalar_prefetch = 0 : i64, scratch_operands = 1 : i64, tpu.core_type = #tpu.core_type<tc>, window_params = [{transform_indices = @transform_0, window_bounds = array<i64: 4, 32, 256>}, {pipeline_mode = #tpu.pipeline_mode<synchronous>, transform_indices = @transform_1, window_bounds = array<i64: 32, 2>}, {pipeline_mode = #tpu.pipeline_mode<synchronous>, transform_indices = @transform_2, window_bounds = array<i64: 1, 2>}, {pipeline_mode = #tpu.pipeline_mode<synchronous>, transform_indices = @transform_3, window_bounds = array<i64: 1, 2>}, {pipeline_mode = #tpu.pipeline_mode<synchronous>, transform_indices = @transform_4, window_bounds = array<i64: 2, 32>}, {pipeline_mode = #tpu.pipeline_mode<synchronous>, transform_indices = @transform_5, window_bounds = array<i64: 1, 32>}, {pipeline_mode = #tpu.pipeline_mode<synchronous>, transform_indices = @transform_6, window_bounds = array<i64: 49, 256>}, {transform_indices = @transform_7, window_bounds = array<i64: 1>}, {transform_indices = @transform_8, window_bounds = array<i64: 4, 32, 256>}]} {
    %c0 = arith.constant 0 : index
    %c0_0 = arith.constant 0 : index
    %c0_1 = arith.constant 0 : index
    %0 = vector.load %arg1[%c0, %c0_0, %c0_1] : memref<4x32x256xf32, #tpu.memory_space<vmem>>, vector<4x32x256xf32>
    %cst = arith.constant dense<0.000000e+00> : vector<4x32xf32>
    %1 = vector.multi_reduction <add>, %0, %cst [2] : vector<4x32x256xf32> to vector<4x32xf32>
    %cst_2 = arith.constant 2.560000e+02 : f32
    %2 = vector.broadcast %cst_2 : f32 to vector<4x32xf32>
    %3 = arith.divf %1, %2 : vector<4x32xf32>
    %cst_3 = arith.constant dense<0xFF800000> : vector<4x256xf32>
    %4 = vector.multi_reduction <maximumf>, %0, %cst_3 [1] : vector<4x32x256xf32> to vector<4x256xf32>
    %c0_4 = arith.constant 0 : index
    %c0_5 = arith.constant 0 : index
    %5 = vector.load %arg2[%c0_4, %c0_5] : memref<32x2xf32, #tpu.memory_space<vmem>>, vector<32x2xf32>
    %cst_6 = arith.constant dense<0.000000e+00> : vector<4x2xf32>
    %6 = tpu.matmul %3, %5, %cst_6 {dimension_numbers = #tpu.dot_dimension_numbers<[1], [0], [0], [1], [0, 0, 1, 1], [], []>} : vector<4x32xf32>, vector<32x2xf32>, vector<4x2xf32> -> vector<4x2xf32>
    %c0_7 = arith.constant 0 : index
    %c0_8 = arith.constant 0 : index
    %7 = vector.load %arg3[%c0_7, %c0_8] : memref<1x2xf32, #tpu.memory_space<vmem>>, vector<1x2xf32>
    %8 = vector.broadcast %7 : vector<1x2xf32> to vector<4x2xf32>
    %9 = arith.addf %6, %8 : vector<4x2xf32>
    %cst_9 = arith.constant 0.000000e+00 : f32
    %10 = vector.broadcast %cst_9 : f32 to vector<4x2xf32>
    %11 = arith.cmpf ogt, %9, %10 : vector<4x2xf32>
    %c0_10 = arith.constant 0 : index
    %c0_11 = arith.constant 0 : index
    %12 = vector.load %arg4[%c0_10, %c0_11] : memref<1x2xf32, #tpu.memory_space<vmem>>, vector<1x2xf32>
    %13 = vector.broadcast %12 : vector<1x2xf32> to vector<4x2xf32>
    %14 = arith.mulf %13, %9 : vector<4x2xf32>
    %15 = arith.select %11, %9, %14 : vector<4x2xi1>, vector<4x2xf32>
    %c0_12 = arith.constant 0 : index
    %c0_13 = arith.constant 0 : index
    %16 = vector.load %arg5[%c0_12, %c0_13] : memref<2x32xf32, #tpu.memory_space<vmem>>, vector<2x32xf32>
    %cst_14 = arith.constant dense<0.000000e+00> : vector<4x32xf32>
    %17 = tpu.matmul %15, %16, %cst_14 {dimension_numbers = #tpu.dot_dimension_numbers<[1], [0], [0], [1], [0, 0, 1, 1], [], []>} : vector<4x2xf32>, vector<2x32xf32>, vector<4x32xf32> -> vector<4x32xf32>
    %c0_15 = arith.constant 0 : index
    %c0_16 = arith.constant 0 : index
    %18 = vector.load %arg6[%c0_15, %c0_16] : memref<1x32xf32, #tpu.memory_space<vmem>>, vector<1x32xf32>
    %19 = vector.broadcast %18 : vector<1x32xf32> to vector<4x32xf32>
    %20 = arith.addf %17, %19 : vector<4x32xf32>
    %21 = arith.negf %20 : vector<4x32xf32>
    %22 = math.exp %21 : vector<4x32xf32>
    %cst_17 = arith.constant 1.000000e+00 : f32
    %23 = vector.broadcast %cst_17 : f32 to vector<4x32xf32>
    %24 = arith.addf %23, %22 : vector<4x32xf32>
    %25 = arith.divf %23, %24 : vector<4x32xf32>
    %cst_18 = arith.constant 0.000000e+00 : f32
    %26 = vector.broadcast %cst_18 : f32 to vector<4x128xf32>
    %c0_19 = arith.constant 0 : index
    %c0_20 = arith.constant 0 : index
    %27 = vector.load %arg10[%c0_19, %c0_20] : memref<4x512xf32, #tpu.memory_space<vmem>>, vector<4x128xf32>
    tpu.vector_store %arg10[%c0_19, %c0_20], %26 {strides = array<i32>} : memref<4x512xf32, #tpu.memory_space<vmem>>, vector<4x128xf32>,
    %c0_21 = arith.constant 0 : index
    %c128 = arith.constant 128 : index
    %28 = vector.load %arg10[%c0_21, %c128] : memref<4x512xf32, #tpu.memory_space<vmem>>, vector<4x256xf32>
    tpu.vector_store %arg10[%c0_21, %c128], %4 {strides = array<i32>} : memref<4x512xf32, #tpu.memory_space<vmem>>, vector<4x256xf32>,
    %cst_22 = arith.constant 0.000000e+00 : f32
    %29 = vector.broadcast %cst_22 : f32 to vector<4x128xf32>
    %c0_23 = arith.constant 0 : index
    %c384 = arith.constant 384 : index
    %30 = vector.load %arg10[%c0_23, %c384] : memref<4x512xf32, #tpu.memory_space<vmem>>, vector<4x128xf32>
    tpu.vector_store %arg10[%c0_23, %c384], %29 {strides = array<i32>} : memref<4x512xf32, #tpu.memory_space<vmem>>, vector<4x128xf32>,
    %c0_24 = arith.constant 0 : index
    %31 = memref.load %arg8[%c0_24] : memref<1xf32, #tpu.memory_space<smem>>
    %32 = vector.broadcast %31 : f32 to vector<4x256xf32>
    %c0_25 = arith.constant 0 : index
    %c77 = arith.constant 77 : index
    %33 = vector.load %arg10[%c0_25, %c77] : memref<4x512xf32, #tpu.memory_space<vmem>>, vector<4x256xf32>
    %c0_26 = arith.constant 0 : index
    %c0_27 = arith.constant 0 : index
    %34 = vector.load %arg7[%c0_26, %c0_27] : memref<49x256xf32, #tpu.memory_space<vmem>>, vector<1x256xf32>
    %35 = vector.broadcast %34 : vector<1x256xf32> to vector<4x256xf32>
    %36 = arith.mulf %35, %33 : vector<4x256xf32>
    %37 = arith.addf %32, %36 : vector<4x256xf32>
    %c0_28 = arith.constant 0 : index
    %c78 = arith.constant 78 : index
    %38 = vector.load %arg10[%c0_28, %c78] : memref<4x512xf32, #tpu.memory_space<vmem>>, vector<4x256xf32>
    %c1 = arith.constant 1 : index
    %c0_29 = arith.constant 0 : index
    %39 = vector.load %arg7[%c1, %c0_29] : memref<49x256xf32, #tpu.memory_space<vmem>>, vector<1x256xf32>
    %40 = vector.broadcast %39 : vector<1x256xf32> to vector<4x256xf32>
    %41 = arith.mulf %40, %38 : vector<4x256xf32>
    %42 = arith.addf %37, %41 : vector<4x256xf32>
    %c0_30 = arith.constant 0 : index
    %c79 = arith.constant 79 : index
    %43 = vector.load %arg10[%c0_30, %c79] : memref<4x512xf32, #tpu.memory_space<vmem>>, vector<4x256xf32>
    %c2 = arith.constant 2 : index
    %c0_31 = arith.constant 0 : index
    %44 = vector.load %arg7[%c2, %c0_31] : memref<49x256xf32, #tpu.memory_space<vmem>>, vector<1x256xf32>
    %45 = vector.broadcast %44 : vector<1x256xf32> to vector<4x256xf32>
    %46 = arith.mulf %45, %43 : vector<4x256xf32>
    %47 = arith.addf %42, %46 : vector<4x256xf32>
    %c0_32 = arith.constant 0 : index
    %c80 = arith.constant 80 : index
    %48 = vector.load %arg10[%c0_32, %c80] : memref<4x512xf32, #tpu.memory_space<vmem>>, vector<4x256xf32>
    %c3 = arith.constant 3 : index
    %c0_33 = arith.constant 0 : index
    %49 = vector.load %arg7[%c3, %c0_33] : memref<49x256xf32, #tpu.memory_space<vmem>>, vector<1x256xf32>
    %50 = vector.broadcast %49 : vector<1x256xf32> to vector<4x256xf32>
    %51 = arith.mulf %50, %48 : vector<4x256xf32>
    %52 = arith.addf %47, %51 : vector<4x256xf32>
    %c0_34 = arith.constant 0 : index
    %c81 = arith.constant 81 : index
    %53 = vector.load %arg10[%c0_34, %c81] : memref<4x512xf32, #tpu.memory_space<vmem>>, vector<4x256xf32>
    %c4 = arith.constant 4 : index
    %c0_35 = arith.constant 0 : index
    %54 = vector.load %arg7[%c4, %c0_35] : memref<49x256xf32, #tpu.memory_space<vmem>>, vector<1x256xf32>
    %55 = vector.broadcast %54 : vector<1x256xf32> to vector<4x256xf32>
    %56 = arith.mulf %55, %53 : vector<4x256xf32>
    %57 = arith.addf %52, %56 : vector<4x256xf32>
    %c0_36 = arith.constant 0 : index
    %c82 = arith.constant 82 : index
    %58 = vector.load %arg10[%c0_36, %c82] : memref<4x512xf32, #tpu.memory_space<vmem>>, vector<4x256xf32>
    %c5 = arith.constant 5 : index
    %c0_37 = arith.constant 0 : index
    %59 = vector.load %arg7[%c5, %c0_37] : memref<49x256xf32, #tpu.memory_space<vmem>>, vector<1x256xf32>
    %60 = vector.broadcast %59 : vector<1x256xf32> to vector<4x256xf32>
    %61 = arith.mulf %60, %58 : vector<4x256xf32>
    %62 = arith.addf %57, %61 : vector<4x256xf32>
    %c0_38 = arith.constant 0 : index
    %c83 = arith.constant 83 : index
    %63 = vector.load %arg10[%c0_38, %c83] : memref<4x512xf32, #tpu.memory_space<vmem>>, vector<4x256xf32>
    %c6 = arith.constant 6 : index
    %c0_39 = arith.constant 0 : index
    %64 = vector.load %arg7[%c6, %c0_39] : memref<49x256xf32, #tpu.memory_space<vmem>>, vector<1x256xf32>
    %65 = vector.broadcast %64 : vector<1x256xf32> to vector<4x256xf32>
    %66 = arith.mulf %65, %63 : vector<4x256xf32>
    %67 = arith.addf %62, %66 : vector<4x256xf32>
    %c0_40 = arith.constant 0 : index
    %c93 = arith.constant 93 : index
    %68 = vector.load %arg10[%c0_40, %c93] : memref<4x512xf32, #tpu.memory_space<vmem>>, vector<4x256xf32>
    %c7 = arith.constant 7 : index
    %c0_41 = arith.constant 0 : index
    %69 = vector.load %arg7[%c7, %c0_41] : memref<49x256xf32, #tpu.memory_space<vmem>>, vector<1x256xf32>
    %70 = vector.broadcast %69 : vector<1x256xf32> to vector<4x256xf32>
    %71 = arith.mulf %70, %68 : vector<4x256xf32>
    %72 = arith.addf %67, %71 : vector<4x256xf32>
    %c0_42 = arith.constant 0 : index
    %c94 = arith.constant 94 : index
    %73 = vector.load %arg10[%c0_42, %c94] : memref<4x512xf32, #tpu.memory_space<vmem>>, vector<4x256xf32>
    %c8 = arith.constant 8 : index
    %c0_43 = arith.constant 0 : index
    %74 = vector.load %arg7[%c8, %c0_43] : memref<49x256xf32, #tpu.memory_space<vmem>>, vector<1x256xf32>
    %75 = vector.broadcast %74 : vector<1x256xf32> to vector<4x256xf32>
    %76 = arith.mulf %75, %73 : vector<4x256xf32>
    %77 = arith.addf %72, %76 : vector<4x256xf32>
    %c0_44 = arith.constant 0 : index
    %c95 = arith.constant 95 : index
    %78 = vector.load %arg10[%c0_44, %c95] : memref<4x512xf32, #tpu.memory_space<vmem>>, vector<4x256xf32>
    %c9 = arith.constant 9 : index
    %c0_45 = arith.constant 0 : index
    %79 = vector.load %arg7[%c9, %c0_45] : memref<49x256xf32, #tpu.memory_space<vmem>>, vector<1x256xf32>
    %80 = vector.broadcast %79 : vector<1x256xf32> to vector<4x256xf32>
    %81 = arith.mulf %80, %78 : vector<4x256xf32>
    %82 = arith.addf %77, %81 : vector<4x256xf32>
    %c0_46 = arith.constant 0 : index
    %c96 = arith.constant 96 : index
    %83 = vector.load %arg10[%c0_46, %c96] : memref<4x512xf32, #tpu.memory_space<vmem>>, vector<4x256xf32>
    %c10 = arith.constant 10 : index
    %c0_47 = arith.constant 0 : index
    %84 = vector.load %arg7[%c10, %c0_47] : memref<49x256xf32, #tpu.memory_space<vmem>>, vector<1x256xf32>
    %85 = vector.broadcast %84 : vector<1x256xf32> to vector<4x256xf32>
    %86 = arith.mulf %85, %83 : vector<4x256xf32>
    %87 = arith.addf %82, %86 : vector<4x256xf32>
    %c0_48 = arith.constant 0 : index
    %c97 = arith.constant 97 : index
    %88 = vector.load %arg10[%c0_48, %c97] : memref<4x512xf32, #tpu.memory_space<vmem>>, vector<4x256xf32>
    %c11 = arith.constant 11 : index
    %c0_49 = arith.constant 0 : index
    %89 = vector.load %arg7[%c11, %c0_49] : memref<49x256xf32, #tpu.memory_space<vmem>>, vector<1x256xf32>
    %90 = vector.broadcast %89 : vector<1x256xf32> to vector<4x256xf32>
    %91 = arith.mulf %90, %88 : vector<4x256xf32>
    %92 = arith.addf %87, %91 : vector<4x256xf32>
    %c0_50 = arith.constant 0 : index
    %c98 = arith.constant 98 : index
    %93 = vector.load %arg10[%c0_50, %c98] : memref<4x512xf32, #tpu.memory_space<vmem>>, vector<4x256xf32>
    %c12 = arith.constant 12 : index
    %c0_51 = arith.constant 0 : index
    %94 = vector.load %arg7[%c12, %c0_51] : memref<49x256xf32, #tpu.memory_space<vmem>>, vector<1x256xf32>
    %95 = vector.broadcast %94 : vector<1x256xf32> to vector<4x256xf32>
    %96 = arith.mulf %95, %93 : vector<4x256xf32>
    %97 = arith.addf %92, %96 : vector<4x256xf32>
    %c0_52 = arith.constant 0 : index
    %c99 = arith.constant 99 : index
    %98 = vector.load %arg10[%c0_52, %c99] : memref<4x512xf32, #tpu.memory_space<vmem>>, vector<4x256xf32>
    %c13 = arith.constant 13 : index
    %c0_53 = arith.constant 0 : index
    %99 = vector.load %arg7[%c13, %c0_53] : memref<49x256xf32, #tpu.memory_space<vmem>>, vector<1x256xf32>
    %100 = vector.broadcast %99 : vector<1x256xf32> to vector<4x256xf32>
    %101 = arith.mulf %100, %98 : vector<4x256xf32>
    %102 = arith.addf %97, %101 : vector<4x256xf32>
    %c0_54 = arith.constant 0 : index
    %c109 = arith.constant 109 : index
    %103 = vector.load %arg10[%c0_54, %c109] : memref<4x512xf32, #tpu.memory_space<vmem>>, vector<4x256xf32>
    %c14 = arith.constant 14 : index
    %c0_55 = arith.constant 0 : index
    %104 = vector.load %arg7[%c14, %c0_55] : memref<49x256xf32, #tpu.memory_space<vmem>>, vector<1x256xf32>
    %105 = vector.broadcast %104 : vector<1x256xf32> to vector<4x256xf32>
    %106 = arith.mulf %105, %103 : vector<4x256xf32>
    %107 = arith.addf %102, %106 : vector<4x256xf32>
    %c0_56 = arith.constant 0 : index
    %c110 = arith.constant 110 : index
    %108 = vector.load %arg10[%c0_56, %c110] : memref<4x512xf32, #tpu.memory_space<vmem>>, vector<4x256xf32>
    %c15 = arith.constant 15 : index
    %c0_57 = arith.constant 0 : index
    %109 = vector.load %arg7[%c15, %c0_57] : memref<49x256xf32, #tpu.memory_space<vmem>>, vector<1x256xf32>
    %110 = vector.broadcast %109 : vector<1x256xf32> to vector<4x256xf32>
    %111 = arith.mulf %110, %108 : vector<4x256xf32>
    %112 = arith.addf %107, %111 : vector<4x256xf32>
    %c0_58 = arith.constant 0 : index
    %c111 = arith.constant 111 : index
    %113 = vector.load %arg10[%c0_58, %c111] : memref<4x512xf32, #tpu.memory_space<vmem>>, vector<4x256xf32>
    %c16 = arith.constant 16 : index
    %c0_59 = arith.constant 0 : index
    %114 = vector.load %arg7[%c16, %c0_59] : memref<49x256xf32, #tpu.memory_space<vmem>>, vector<1x256xf32>
    %115 = vector.broadcast %114 : vector<1x256xf32> to vector<4x256xf32>
    %116 = arith.mulf %115, %113 : vector<4x256xf32>
    %117 = arith.addf %112, %116 : vector<4x256xf32>
    %c0_60 = arith.constant 0 : index
    %c112 = arith.constant 112 : index
    %118 = vector.load %arg10[%c0_60, %c112] : memref<4x512xf32, #tpu.memory_space<vmem>>, vector<4x256xf32>
    %c17 = arith.constant 17 : index
    %c0_61 = arith.constant 0 : index
    %119 = vector.load %arg7[%c17, %c0_61] : memref<49x256xf32, #tpu.memory_space<vmem>>, vector<1x256xf32>
    %120 = vector.broadcast %119 : vector<1x256xf32> to vector<4x256xf32>
    %121 = arith.mulf %120, %118 : vector<4x256xf32>
    %122 = arith.addf %117, %121 : vector<4x256xf32>
    %c0_62 = arith.constant 0 : index
    %c113 = arith.constant 113 : index
    %123 = vector.load %arg10[%c0_62, %c113] : memref<4x512xf32, #tpu.memory_space<vmem>>, vector<4x256xf32>
    %c18 = arith.constant 18 : index
    %c0_63 = arith.constant 0 : index
    %124 = vector.load %arg7[%c18, %c0_63] : memref<49x256xf32, #tpu.memory_space<vmem>>, vector<1x256xf32>
    %125 = vector.broadcast %124 : vector<1x256xf32> to vector<4x256xf32>
    %126 = arith.mulf %125, %123 : vector<4x256xf32>
    %127 = arith.addf %122, %126 : vector<4x256xf32>
    %c0_64 = arith.constant 0 : index
    %c114 = arith.constant 114 : index
    %128 = vector.load %arg10[%c0_64, %c114] : memref<4x512xf32, #tpu.memory_space<vmem>>, vector<4x256xf32>
    %c19 = arith.constant 19 : index
    %c0_65 = arith.constant 0 : index
    %129 = vector.load %arg7[%c19, %c0_65] : memref<49x256xf32, #tpu.memory_space<vmem>>, vector<1x256xf32>
    %130 = vector.broadcast %129 : vector<1x256xf32> to vector<4x256xf32>
    %131 = arith.mulf %130, %128 : vector<4x256xf32>
    %132 = arith.addf %127, %131 : vector<4x256xf32>
    %c0_66 = arith.constant 0 : index
    %c115 = arith.constant 115 : index
    %133 = vector.load %arg10[%c0_66, %c115] : memref<4x512xf32, #tpu.memory_space<vmem>>, vector<4x256xf32>
    %c20 = arith.constant 20 : index
    %c0_67 = arith.constant 0 : index
    %134 = vector.load %arg7[%c20, %c0_67] : memref<49x256xf32, #tpu.memory_space<vmem>>, vector<1x256xf32>
    %135 = vector.broadcast %134 : vector<1x256xf32> to vector<4x256xf32>
    %136 = arith.mulf %135, %133 : vector<4x256xf32>
    %137 = arith.addf %132, %136 : vector<4x256xf32>
    %c0_68 = arith.constant 0 : index
    %c125 = arith.constant 125 : index
    %138 = vector.load %arg10[%c0_68, %c125] : memref<4x512xf32, #tpu.memory_space<vmem>>, vector<4x256xf32>
    %c21 = arith.constant 21 : index
    %c0_69 = arith.constant 0 : index
    %139 = vector.load %arg7[%c21, %c0_69] : memref<49x256xf32, #tpu.memory_space<vmem>>, vector<1x256xf32>
    %140 = vector.broadcast %139 : vector<1x256xf32> to vector<4x256xf32>
    %141 = arith.mulf %140, %138 : vector<4x256xf32>
    %142 = arith.addf %137, %141 : vector<4x256xf32>
    %c0_70 = arith.constant 0 : index
    %c126 = arith.constant 126 : index
    %143 = vector.load %arg10[%c0_70, %c126] : memref<4x512xf32, #tpu.memory_space<vmem>>, vector<4x256xf32>
    %c22 = arith.constant 22 : index
    %c0_71 = arith.constant 0 : index
    %144 = vector.load %arg7[%c22, %c0_71] : memref<49x256xf32, #tpu.memory_space<vmem>>, vector<1x256xf32>
    %145 = vector.broadcast %144 : vector<1x256xf32> to vector<4x256xf32>
    %146 = arith.mulf %145, %143 : vector<4x256xf32>
    %147 = arith.addf %142, %146 : vector<4x256xf32>
    %c0_72 = arith.constant 0 : index
    %c127 = arith.constant 127 : index
    %148 = vector.load %arg10[%c0_72, %c127] : memref<4x512xf32, #tpu.memory_space<vmem>>, vector<4x256xf32>
    %c23 = arith.constant 23 : index
    %c0_73 = arith.constant 0 : index
    %149 = vector.load %arg7[%c23, %c0_73] : memref<49x256xf32, #tpu.memory_space<vmem>>, vector<1x256xf32>
    %150 = vector.broadcast %149 : vector<1x256xf32> to vector<4x256xf32>
    %151 = arith.mulf %150, %148 : vector<4x256xf32>
    %152 = arith.addf %147, %151 : vector<4x256xf32>
    %c0_74 = arith.constant 0 : index
    %c128_75 = arith.constant 128 : index
    %153 = vector.load %arg10[%c0_74, %c128_75] : memref<4x512xf32, #tpu.memory_space<vmem>>, vector<4x256xf32>
    %c24 = arith.constant 24 : index
    %c0_76 = arith.constant 0 : index
    %154 = vector.load %arg7[%c24, %c0_76] : memref<49x256xf32, #tpu.memory_space<vmem>>, vector<1x256xf32>
    %155 = vector.broadcast %154 : vector<1x256xf32> to vector<4x256xf32>
    %156 = arith.mulf %155, %153 : vector<4x256xf32>
    %157 = arith.addf %152, %156 : vector<4x256xf32>
    %c0_77 = arith.constant 0 : index
    %c129 = arith.constant 129 : index
    %158 = vector.load %arg10[%c0_77, %c129] : memref<4x512xf32, #tpu.memory_space<vmem>>, vector<4x256xf32>
    %c25 = arith.constant 25 : index
    %c0_78 = arith.constant 0 : index
    %159 = vector.load %arg7[%c25, %c0_78] : memref<49x256xf32, #tpu.memory_space<vmem>>, vector<1x256xf32>
    %160 = vector.broadcast %159 : vector<1x256xf32> to vector<4x256xf32>
    %161 = arith.mulf %160, %158 : vector<4x256xf32>
    %162 = arith.addf %157, %161 : vector<4x256xf32>
    %c0_79 = arith.constant 0 : index
    %c130 = arith.constant 130 : index
    %163 = vector.load %arg10[%c0_79, %c130] : memref<4x512xf32, #tpu.memory_space<vmem>>, vector<4x256xf32>
    %c26 = arith.constant 26 : index
    %c0_80 = arith.constant 0 : index
    %164 = vector.load %arg7[%c26, %c0_80] : memref<49x256xf32, #tpu.memory_space<vmem>>, vector<1x256xf32>
    %165 = vector.broadcast %164 : vector<1x256xf32> to vector<4x256xf32>
    %166 = arith.mulf %165, %163 : vector<4x256xf32>
    %167 = arith.addf %162, %166 : vector<4x256xf32>
    %c0_81 = arith.constant 0 : index
    %c131 = arith.constant 131 : index
    %168 = vector.load %arg10[%c0_81, %c131] : memref<4x512xf32, #tpu.memory_space<vmem>>, vector<4x256xf32>
    %c27 = arith.constant 27 : index
    %c0_82 = arith.constant 0 : index
    %169 = vector.load %arg7[%c27, %c0_82] : memref<49x256xf32, #tpu.memory_space<vmem>>, vector<1x256xf32>
    %170 = vector.broadcast %169 : vector<1x256xf32> to vector<4x256xf32>
    %171 = arith.mulf %170, %168 : vector<4x256xf32>
    %172 = arith.addf %167, %171 : vector<4x256xf32>
    %c0_83 = arith.constant 0 : index
    %c141 = arith.constant 141 : index
    %173 = vector.load %arg10[%c0_83, %c141] : memref<4x512xf32, #tpu.memory_space<vmem>>, vector<4x256xf32>
    %c28 = arith.constant 28 : index
    %c0_84 = arith.constant 0 : index
    %174 = vector.load %arg7[%c28, %c0_84] : memref<49x256xf32, #tpu.memory_space<vmem>>, vector<1x256xf32>
    %175 = vector.broadcast %174 : vector<1x256xf32> to vector<4x256xf32>
    %176 = arith.mulf %175, %173 : vector<4x256xf32>
    %177 = arith.addf %172, %176 : vector<4x256xf32>
    %c0_85 = arith.constant 0 : index
    %c142 = arith.constant 142 : index
    %178 = vector.load %arg10[%c0_85, %c142] : memref<4x512xf32, #tpu.memory_space<vmem>>, vector<4x256xf32>
    %c29 = arith.constant 29 : index
    %c0_86 = arith.constant 0 : index
    %179 = vector.load %arg7[%c29, %c0_86] : memref<49x256xf32, #tpu.memory_space<vmem>>, vector<1x256xf32>
    %180 = vector.broadcast %179 : vector<1x256xf32> to vector<4x256xf32>
    %181 = arith.mulf %180, %178 : vector<4x256xf32>
    %182 = arith.addf %177, %181 : vector<4x256xf32>
    %c0_87 = arith.constant 0 : index
    %c143 = arith.constant 143 : index
    %183 = vector.load %arg10[%c0_87, %c143] : memref<4x512xf32, #tpu.memory_space<vmem>>, vector<4x256xf32>
    %c30 = arith.constant 30 : index
    %c0_88 = arith.constant 0 : index
    %184 = vector.load %arg7[%c30, %c0_88] : memref<49x256xf32, #tpu.memory_space<vmem>>, vector<1x256xf32>
    %185 = vector.broadcast %184 : vector<1x256xf32> to vector<4x256xf32>
    %186 = arith.mulf %185, %183 : vector<4x256xf32>
    %187 = arith.addf %182, %186 : vector<4x256xf32>
    %c0_89 = arith.constant 0 : index
    %c144 = arith.constant 144 : index
    %188 = vector.load %arg10[%c0_89, %c144] : memref<4x512xf32, #tpu.memory_space<vmem>>, vector<4x256xf32>
    %c31 = arith.constant 31 : index
    %c0_90 = arith.constant 0 : index
    %189 = vector.load %arg7[%c31, %c0_90] : memref<49x256xf32, #tpu.memory_space<vmem>>, vector<1x256xf32>
    %190 = vector.broadcast %189 : vector<1x256xf32> to vector<4x256xf32>
    %191 = arith.mulf %190, %188 : vector<4x256xf32>
    %192 = arith.addf %187, %191 : vector<4x256xf32>
    %c0_91 = arith.constant 0 : index
    %c145 = arith.constant 145 : index
    %193 = vector.load %arg10[%c0_91, %c145] : memref<4x512xf32, #tpu.memory_space<vmem>>, vector<4x256xf32>
    %c32 = arith.constant 32 : index
    %c0_92 = arith.constant 0 : index
    %194 = vector.load %arg7[%c32, %c0_92] : memref<49x256xf32, #tpu.memory_space<vmem>>, vector<1x256xf32>
    %195 = vector.broadcast %194 : vector<1x256xf32> to vector<4x256xf32>
    %196 = arith.mulf %195, %193 : vector<4x256xf32>
    %197 = arith.addf %192, %196 : vector<4x256xf32>
    %c0_93 = arith.constant 0 : index
    %c146 = arith.constant 146 : index
    %198 = vector.load %arg10[%c0_93, %c146] : memref<4x512xf32, #tpu.memory_space<vmem>>, vector<4x256xf32>
    %c33 = arith.constant 33 : index
    %c0_94 = arith.constant 0 : index
    %199 = vector.load %arg7[%c33, %c0_94] : memref<49x256xf32, #tpu.memory_space<vmem>>, vector<1x256xf32>
    %200 = vector.broadcast %199 : vector<1x256xf32> to vector<4x256xf32>
    %201 = arith.mulf %200, %198 : vector<4x256xf32>
    %202 = arith.addf %197, %201 : vector<4x256xf32>
    %c0_95 = arith.constant 0 : index
    %c147 = arith.constant 147 : index
    %203 = vector.load %arg10[%c0_95, %c147] : memref<4x512xf32, #tpu.memory_space<vmem>>, vector<4x256xf32>
    %c34 = arith.constant 34 : index
    %c0_96 = arith.constant 0 : index
    %204 = vector.load %arg7[%c34, %c0_96] : memref<49x256xf32, #tpu.memory_space<vmem>>, vector<1x256xf32>
    %205 = vector.broadcast %204 : vector<1x256xf32> to vector<4x256xf32>
    %206 = arith.mulf %205, %203 : vector<4x256xf32>
    %207 = arith.addf %202, %206 : vector<4x256xf32>
    %c0_97 = arith.constant 0 : index
    %c157 = arith.constant 157 : index
    %208 = vector.load %arg10[%c0_97, %c157] : memref<4x512xf32, #tpu.memory_space<vmem>>, vector<4x256xf32>
    %c35 = arith.constant 35 : index
    %c0_98 = arith.constant 0 : index
    %209 = vector.load %arg7[%c35, %c0_98] : memref<49x256xf32, #tpu.memory_space<vmem>>, vector<1x256xf32>
    %210 = vector.broadcast %209 : vector<1x256xf32> to vector<4x256xf32>
    %211 = arith.mulf %210, %208 : vector<4x256xf32>
    %212 = arith.addf %207, %211 : vector<4x256xf32>
    %c0_99 = arith.constant 0 : index
    %c158 = arith.constant 158 : index
    %213 = vector.load %arg10[%c0_99, %c158] : memref<4x512xf32, #tpu.memory_space<vmem>>, vector<4x256xf32>
    %c36 = arith.constant 36 : index
    %c0_100 = arith.constant 0 : index
    %214 = vector.load %arg7[%c36, %c0_100] : memref<49x256xf32, #tpu.memory_space<vmem>>, vector<1x256xf32>
    %215 = vector.broadcast %214 : vector<1x256xf32> to vector<4x256xf32>
    %216 = arith.mulf %215, %213 : vector<4x256xf32>
    %217 = arith.addf %212, %216 : vector<4x256xf32>
    %c0_101 = arith.constant 0 : index
    %c159 = arith.constant 159 : index
    %218 = vector.load %arg10[%c0_101, %c159] : memref<4x512xf32, #tpu.memory_space<vmem>>, vector<4x256xf32>
    %c37 = arith.constant 37 : index
    %c0_102 = arith.constant 0 : index
    %219 = vector.load %arg7[%c37, %c0_102] : memref<49x256xf32, #tpu.memory_space<vmem>>, vector<1x256xf32>
    %220 = vector.broadcast %219 : vector<1x256xf32> to vector<4x256xf32>
    %221 = arith.mulf %220, %218 : vector<4x256xf32>
    %222 = arith.addf %217, %221 : vector<4x256xf32>
    %c0_103 = arith.constant 0 : index
    %c160 = arith.constant 160 : index
    %223 = vector.load %arg10[%c0_103, %c160] : memref<4x512xf32, #tpu.memory_space<vmem>>, vector<4x256xf32>
    %c38 = arith.constant 38 : index
    %c0_104 = arith.constant 0 : index
    %224 = vector.load %arg7[%c38, %c0_104] : memref<49x256xf32, #tpu.memory_space<vmem>>, vector<1x256xf32>
    %225 = vector.broadcast %224 : vector<1x256xf32> to vector<4x256xf32>
    %226 = arith.mulf %225, %223 : vector<4x256xf32>
    %227 = arith.addf %222, %226 : vector<4x256xf32>
    %c0_105 = arith.constant 0 : index
    %c161 = arith.constant 161 : index
    %228 = vector.load %arg10[%c0_105, %c161] : memref<4x512xf32, #tpu.memory_space<vmem>>, vector<4x256xf32>
    %c39 = arith.constant 39 : index
    %c0_106 = arith.constant 0 : index
    %229 = vector.load %arg7[%c39, %c0_106] : memref<49x256xf32, #tpu.memory_space<vmem>>, vector<1x256xf32>
    %230 = vector.broadcast %229 : vector<1x256xf32> to vector<4x256xf32>
    %231 = arith.mulf %230, %228 : vector<4x256xf32>
    %232 = arith.addf %227, %231 : vector<4x256xf32>
    %c0_107 = arith.constant 0 : index
    %c162 = arith.constant 162 : index
    %233 = vector.load %arg10[%c0_107, %c162] : memref<4x512xf32, #tpu.memory_space<vmem>>, vector<4x256xf32>
    %c40 = arith.constant 40 : index
    %c0_108 = arith.constant 0 : index
    %234 = vector.load %arg7[%c40, %c0_108] : memref<49x256xf32, #tpu.memory_space<vmem>>, vector<1x256xf32>
    %235 = vector.broadcast %234 : vector<1x256xf32> to vector<4x256xf32>
    %236 = arith.mulf %235, %233 : vector<4x256xf32>
    %237 = arith.addf %232, %236 : vector<4x256xf32>
    %c0_109 = arith.constant 0 : index
    %c163 = arith.constant 163 : index
    %238 = vector.load %arg10[%c0_109, %c163] : memref<4x512xf32, #tpu.memory_space<vmem>>, vector<4x256xf32>
    %c41 = arith.constant 41 : index
    %c0_110 = arith.constant 0 : index
    %239 = vector.load %arg7[%c41, %c0_110] : memref<49x256xf32, #tpu.memory_space<vmem>>, vector<1x256xf32>
    %240 = vector.broadcast %239 : vector<1x256xf32> to vector<4x256xf32>
    %241 = arith.mulf %240, %238 : vector<4x256xf32>
    %242 = arith.addf %237, %241 : vector<4x256xf32>
    %c0_111 = arith.constant 0 : index
    %c173 = arith.constant 173 : index
    %243 = vector.load %arg10[%c0_111, %c173] : memref<4x512xf32, #tpu.memory_space<vmem>>, vector<4x256xf32>
    %c42 = arith.constant 42 : index
    %c0_112 = arith.constant 0 : index
    %244 = vector.load %arg7[%c42, %c0_112] : memref<49x256xf32, #tpu.memory_space<vmem>>, vector<1x256xf32>
    %245 = vector.broadcast %244 : vector<1x256xf32> to vector<4x256xf32>
    %246 = arith.mulf %245, %243 : vector<4x256xf32>
    %247 = arith.addf %242, %246 : vector<4x256xf32>
    %c0_113 = arith.constant 0 : index
    %c174 = arith.constant 174 : index
    %248 = vector.load %arg10[%c0_113, %c174] : memref<4x512xf32, #tpu.memory_space<vmem>>, vector<4x256xf32>
    %c43 = arith.constant 43 : index
    %c0_114 = arith.constant 0 : index
    %249 = vector.load %arg7[%c43, %c0_114] : memref<49x256xf32, #tpu.memory_space<vmem>>, vector<1x256xf32>
    %250 = vector.broadcast %249 : vector<1x256xf32> to vector<4x256xf32>
    %251 = arith.mulf %250, %248 : vector<4x256xf32>
    %252 = arith.addf %247, %251 : vector<4x256xf32>
    %c0_115 = arith.constant 0 : index
    %c175 = arith.constant 175 : index
    %253 = vector.load %arg10[%c0_115, %c175] : memref<4x512xf32, #tpu.memory_space<vmem>>, vector<4x256xf32>
    %c44 = arith.constant 44 : index
    %c0_116 = arith.constant 0 : index
    %254 = vector.load %arg7[%c44, %c0_116] : memref<49x256xf32, #tpu.memory_space<vmem>>, vector<1x256xf32>
    %255 = vector.broadcast %254 : vector<1x256xf32> to vector<4x256xf32>
    %256 = arith.mulf %255, %253 : vector<4x256xf32>
    %257 = arith.addf %252, %256 : vector<4x256xf32>
    %c0_117 = arith.constant 0 : index
    %c176 = arith.constant 176 : index
    %258 = vector.load %arg10[%c0_117, %c176] : memref<4x512xf32, #tpu.memory_space<vmem>>, vector<4x256xf32>
    %c45 = arith.constant 45 : index
    %c0_118 = arith.constant 0 : index
    %259 = vector.load %arg7[%c45, %c0_118] : memref<49x256xf32, #tpu.memory_space<vmem>>, vector<1x256xf32>
    %260 = vector.broadcast %259 : vector<1x256xf32> to vector<4x256xf32>
    %261 = arith.mulf %260, %258 : vector<4x256xf32>
    %262 = arith.addf %257, %261 : vector<4x256xf32>
    %c0_119 = arith.constant 0 : index
    %c177 = arith.constant 177 : index
    %263 = vector.load %arg10[%c0_119, %c177] : memref<4x512xf32, #tpu.memory_space<vmem>>, vector<4x256xf32>
    %c46 = arith.constant 46 : index
    %c0_120 = arith.constant 0 : index
    %264 = vector.load %arg7[%c46, %c0_120] : memref<49x256xf32, #tpu.memory_space<vmem>>, vector<1x256xf32>
    %265 = vector.broadcast %264 : vector<1x256xf32> to vector<4x256xf32>
    %266 = arith.mulf %265, %263 : vector<4x256xf32>
    %267 = arith.addf %262, %266 : vector<4x256xf32>
    %c0_121 = arith.constant 0 : index
    %c178 = arith.constant 178 : index
    %268 = vector.load %arg10[%c0_121, %c178] : memref<4x512xf32, #tpu.memory_space<vmem>>, vector<4x256xf32>
    %c47 = arith.constant 47 : index
    %c0_122 = arith.constant 0 : index
    %269 = vector.load %arg7[%c47, %c0_122] : memref<49x256xf32, #tpu.memory_space<vmem>>, vector<1x256xf32>
    %270 = vector.broadcast %269 : vector<1x256xf32> to vector<4x256xf32>
    %271 = arith.mulf %270, %268 : vector<4x256xf32>
    %272 = arith.addf %267, %271 : vector<4x256xf32>
    %c0_123 = arith.constant 0 : index
    %c179 = arith.constant 179 : index
    %273 = vector.load %arg10[%c0_123, %c179] : memref<4x512xf32, #tpu.memory_space<vmem>>, vector<4x256xf32>
    %c48 = arith.constant 48 : index
    %c0_124 = arith.constant 0 : index
    %274 = vector.load %arg7[%c48, %c0_124] : memref<49x256xf32, #tpu.memory_space<vmem>>, vector<1x256xf32>
    %275 = vector.broadcast %274 : vector<1x256xf32> to vector<4x256xf32>
    %276 = arith.mulf %275, %273 : vector<4x256xf32>
    %277 = arith.addf %272, %276 : vector<4x256xf32>
    %278 = arith.negf %277 : vector<4x256xf32>
    %279 = math.exp %278 : vector<4x256xf32>
    %cst_125 = arith.constant 1.000000e+00 : f32
    %280 = vector.broadcast %cst_125 : f32 to vector<4x256xf32>
    %281 = arith.addf %280, %279 : vector<4x256xf32>
    %282 = arith.divf %280, %281 : vector<4x256xf32>
    %c0_126 = arith.constant 0 : index
    %c0_127 = arith.constant 0 : index
    %c0_128 = arith.constant 0 : index
    %283 = vector.load %arg1[%c0_126, %c0_127, %c0_128] : memref<4x32x256xf32, #tpu.memory_space<vmem>>, vector<4x32x256xf32>
    %284 = vector.shape_cast %282 : vector<4x256xf32> to vector<4x1x256xf32>
    %285 = vector.broadcast %284 : vector<4x1x256xf32> to vector<4x32x256xf32>
    %286 = arith.mulf %283, %285 : vector<4x32x256xf32>
    %287 = vector.shape_cast %25 : vector<4x32xf32> to vector<4x32x1xf32>
    %288 = vector.broadcast %287 : vector<4x32x1xf32> to vector<4x32x256xf32>
    %289 = arith.mulf %286, %288 : vector<4x32x256xf32>
    %c0_129 = arith.constant 0 : index
    %c0_130 = arith.constant 0 : index
    %c0_131 = arith.constant 0 : index
    %290 = vector.load %arg9[%c0_129, %c0_130, %c0_131] : memref<4x32x256xf32, #tpu.memory_space<vmem>>, vector<4x32x256xf32>
    tpu.vector_store %arg9[%c0_129, %c0_130, %c0_131], %289 {strides = array<i32>} : memref<4x32x256xf32, #tpu.memory_space<vmem>>, vector<4x32x256xf32>,
    return
  }
  func.func @transform_0(%arg0: i32) -> (i32, i32, i32) {
    %c0_i32 = arith.constant 0 : i32
    %c0_i32_0 = arith.constant 0 : i32
    %c0_i32_1 = arith.constant 0 : i32
    return %arg0, %c0_i32, %c0_i32_0 : i32, i32, i32
  }
  func.func @transform_1(%arg0: i32) -> (i32, i32) {
    %c0_i32 = arith.constant 0 : i32
    %c0_i32_0 = arith.constant 0 : i32
    %c0_i32_1 = arith.constant 0 : i32
    return %c0_i32, %c0_i32_0 : i32, i32
  }
  func.func @transform_2(%arg0: i32) -> (i32, i32) {
    %c0_i32 = arith.constant 0 : i32
    %c0_i32_0 = arith.constant 0 : i32
    %c0_i32_1 = arith.constant 0 : i32
    return %c0_i32, %c0_i32_0 : i32, i32
  }
  func.func @transform_3(%arg0: i32) -> (i32, i32) {
    %c0_i32 = arith.constant 0 : i32
    %c0_i32_0 = arith.constant 0 : i32
    %c0_i32_1 = arith.constant 0 : i32
    return %c0_i32, %c0_i32_0 : i32, i32
  }
  func.func @transform_4(%arg0: i32) -> (i32, i32) {
    %c0_i32 = arith.constant 0 : i32
    %c0_i32_0 = arith.constant 0 : i32
    %c0_i32_1 = arith.constant 0 : i32
    return %c0_i32, %c0_i32_0 : i32, i32
  }
  func.func @transform_5(%arg0: i32) -> (i32, i32) {
    %c0_i32 = arith.constant 0 : i32
    %c0_i32_0 = arith.constant 0 : i32
    %c0_i32_1 = arith.constant 0 : i32
    return %c0_i32, %c0_i32_0 : i32, i32
  }
  func.func @transform_6(%arg0: i32) -> (i32, i32) {
    %c0_i32 = arith.constant 0 : i32
    %c0_i32_0 = arith.constant 0 : i32
    %c0_i32_1 = arith.constant 0 : i32
    return %c0_i32, %c0_i32_0 : i32, i32
  }
  func.func @transform_7(%arg0: i32) -> i32 {
    %c0_i32 = arith.constant 0 : i32
    %c0_i32_0 = arith.constant 0 : i32
    return %c0_i32 : i32
  }
  func.func @transform_8(%arg0: i32) -> (i32, i32, i32) {
    %c0_i32 = arith.constant 0 : i32
    %c0_i32_0 = arith.constant 0 : i32
    %c0_i32_1 = arith.constant 0 : i32
    return %arg0, %c0_i32, %c0_i32_0 : i32, i32, i32
  }
}

</mosaic_0001>

<llo_original>
// kernel: tpu_custom_call.1
$region0: #{tpu_custom_call.1}
  #allocation0 [shape = 'u32[]', space=smem, size = 0x4, offset = 0x4, fixed_abs, tag = 'smem constant byte address 0x4 - core index']
  #allocation1 [shape = 'u32[144,128]{1,0:T(1,128)}', space=vmem, size = 0x12000, scoped, tag = 'internal scratch']
  #allocation2 [shape = 'f32[4,512]{1,0:T(4,128)}', space=vmem, size = 0x2000, scoped, tag = 'scratch operand']
  #allocation3 [shape = 'f32[1]{0:T(128)S(6)}', space=smem, size = 0x200, scoped, tag = 'scoped memory for tpu_custom_call.1']
  %s0 = inlined_call_operand.hbm [shape: f32[4,32,256], index: 0, kind: input, shape index: {}]
  %s1 = inlined_call_operand.vmem [shape: f32[32,2], index: 1, kind: input, shape index: {}]
  %s2 = inlined_call_operand.vmem [shape: f32[1,2], index: 2, kind: input, shape index: {}]
  %s3 = inlined_call_operand.vmem [shape: f32[1,2], index: 3, kind: input, shape index: {}]
  %s4 = inlined_call_operand.vmem [shape: f32[2,32], index: 4, kind: input, shape index: {}]
  %s5 = inlined_call_operand.vmem [shape: f32[1,32], index: 5, kind: input, shape index: {}]
  %s6 = inlined_call_operand.hbm [shape: f32[49,256], index: 6, kind: input, shape index: {}]
  %s7 = inlined_call_operand.<no memory space> [shape: f32[1], index: 7, kind: input, shape index: {}]
  %s8 = inlined_call_operand.hbm [shape: f32[4,32,256], index: 8, kind: output, shape index: {}]
  %s9 = sld [smem:[#allocation0]]
  $region50: #{tpu_custom_call.1} parent=0
    _
  %s11 = ssub.s32 1, %s9
  %s12 = scalar_select 0, %s11, %s9
  %13 = sst [smem:[#allocation3]] %s7
  $region1: #{tpu_custom_call.1} parent=0
    #allocation4 [shape = 'u8[131072]{0}', space=vmem, size = 0x20000, scoped, tag = 'input window, operand 0, single buffered']
    #allocation5 [shape = 's32[1]{0}', space=sflag, size = 0x4, scoped, tag = 'scoped memory for tpu_custom_call.1']
    #allocation6 [shape = 's32[1]{0}', space=sflag, size = 0x4, scoped, tag = 'scoped memory for tpu_custom_call.1']
    #allocation7 [shape = 'u8[57344]{0}', space=vmem, size = 0xe000, scoped, tag = 'input window, operand 6, single buffered']
    #allocation8 [shape = 's32[1]{0}', space=sflag, size = 0x4, scoped, tag = 'scoped memory for tpu_custom_call.1']
    #allocation9 [shape = 'u8[131072]{0}', space=vmem, size = 0x20000, scoped, tag = 'output window, operand 0, single buffered']
    %14 = vsyncpa [#allocation5], 0
    %15 = vsyncpa [#allocation8], 0
    %16 = vsyncpa [#allocation6], 0
    // Predicated region
    $region2: #{tpu_custom_call.1} parent=1 // pred_check
      _
    $region3: #{tpu_custom_call.1} parent=1 // pred_check_branch
      %18 = sbr.rel (0) target = $region5
    $region4: #{tpu_custom_call.1} parent=1 // pred_region
      %s20 = ssub.s32 4096, 4096
      %21 = vsyncadd [#allocation5], %s20
      %s22 = sshll.u32 [#allocation4], 4
      %s23 = int_to_ptr.vmem [resolvable:$true] %s22
      %28 = dma.hbm_to_vmem [thread:$0]  %s0, 4096, %s23, [#allocation5], 256, 256, 16
    $region5: #{tpu_custom_call.1} parent=1 // pred_fallthru
      _
    // Predicated region
    $region6: #{tpu_custom_call.1} parent=1 // pred_check
      _
    $region7: #{tpu_custom_call.1} parent=1 // pred_check_branch
      %30 = sbr.rel (0) target = $region9
    $region8: #{tpu_custom_call.1} parent=1 // pred_region
      _
    $region9: #{tpu_custom_call.1} parent=1 // pred_fallthru
      _
    // Predicated region
    $region10: #{tpu_custom_call.1} parent=1 // pred_check
      _
    $region11: #{tpu_custom_call.1} parent=1 // pred_check_branch
      %32 = sbr.rel (0) target = $region13
    $region12: #{tpu_custom_call.1} parent=1 // pred_region
      _
    $region13: #{tpu_custom_call.1} parent=1 // pred_fallthru
      _
    // Predicated region
    $region14: #{tpu_custom_call.1} parent=1 // pred_check
      _
    $region15: #{tpu_custom_call.1} parent=1 // pred_check_branch
      %34 = sbr.rel (0) target = $region17
    $region16: #{tpu_custom_call.1} parent=1 // pred_region
      _
    $region17: #{tpu_custom_call.1} parent=1 // pred_fallthru
      _
    // Predicated region
    $region18: #{tpu_custom_call.1} parent=1 // pred_check
      _
    $region19: #{tpu_custom_call.1} parent=1 // pred_check_branch
      %36 = sbr.rel (0) target = $region21
    $region20: #{tpu_custom_call.1} parent=1 // pred_region
      _
    $region21: #{tpu_custom_call.1} parent=1 // pred_fallthru
      _
    // Predicated region
    $region22: #{tpu_custom_call.1} parent=1 // pred_check
      _
    $region23: #{tpu_custom_call.1} parent=1 // pred_check_branch
      %38 = sbr.rel (0) target = $region25
    $region24: #{tpu_custom_call.1} parent=1 // pred_region
      _
    $region25: #{tpu_custom_call.1} parent=1 // pred_fallthru
      _
    // Predicated region
    $region26: #{tpu_custom_call.1} parent=1 // pred_check
      _
    $region27: #{tpu_custom_call.1} parent=1 // pred_check_branch
      %40 = sbr.rel (0) target = $region29
    $region28: #{tpu_custom_call.1} parent=1 // pred_region
      %s42 = ssub.s32 1792, 1792
      %43 = vsyncadd [#allocation8], %s42
      %s44 = sshll.u32 [#allocation7], 4
      %s45 = int_to_ptr.vmem [resolvable:$true] %s44
      %50 = dma.hbm_to_vmem [thread:$0]  %s6, 1792, %s45, [#allocation8], 256, 256, 16
    $region29: #{tpu_custom_call.1} parent=1 // pred_fallthru
      _
    // Predicated region
    $region30: #{tpu_custom_call.1} parent=1 // pred_check
      _
    $region31: #{tpu_custom_call.1} parent=1 // pred_check_branch
      %52 = sbr.rel (0) target = $region33
    $region32: #{tpu_custom_call.1} parent=1 // pred_region
      _
    $region33: #{tpu_custom_call.1} parent=1 // pred_fallthru
      _
    // Predicated region
    $region34: #{tpu_custom_call.1} parent=1 // pred_check
      _
    $region35: #{tpu_custom_call.1} parent=1 // pred_check_branch
      %54 = sbr.rel (0) target = $region37
    $region36: #{tpu_custom_call.1} parent=1 // pred_region
      %55 = dma.done [#allocation5], 4096
    $region37: #{tpu_custom_call.1} parent=1 // pred_fallthru
      _
    // Predicated region
    $region38: #{tpu_custom_call.1} parent=1 // pred_check
      _
    $region39: #{tpu_custom_call.1} parent=1 // pred_check_branch
      %57 = sbr.rel (0) target = $region41
    $region40: #{tpu_custom_call.1} parent=1 // pred_region
      %58 = dma.done [#allocation8], 1792
    $region41: #{tpu_custom_call.1} parent=1 // pred_fallthru
      _
    %v59 = vld [vmem:[#allocation4] sm:$0xff]
    %v60 = vld [vmem:[#allocation4 + $0x8] sm:$0xff]
    %v61 = vld [vmem:[#allocation4 + $0x10] sm:$0xff]
    %v62 = vld [vmem:[#allocation4 + $0x18] sm:$0xff]
    %v63 = vld [vmem:[#allocation4 + $0x20] sm:$0xff]
    %v64 = vld [vmem:[#allocation4 + $0x28] sm:$0xff]
    %v65 = vld [vmem:[#allocation4 + $0x30] sm:$0xff]
    %v66 = vld [vmem:[#allocation4 + $0x38] sm:$0xff]
    %v67 = vld [vmem:[#allocation4 + $0x40] sm:$0xff]
    %v68 = vld [vmem:[#allocation4 + $0x48] sm:$0xff]
    %v69 = vld [vmem:[#allocation4 + $0x50] sm:$0xff]
    %v70 = vld [vmem:[#allocation4 + $0x58] sm:$0xff]
    %v71 = vld [vmem:[#allocation4 + $0x60] sm:$0xff]
    %v72 = vld [vmem:[#allocation4 + $0x68] sm:$0xff]
    %v73 = vld [vmem:[#allocation4 + $0x70] sm:$0xff]
    %v74 = vld [vmem:[#allocation4 + $0x78] sm:$0xff]
    %v75 = vld [vmem:[#allocation4 + $0x80] sm:$0xff]
    %v76 = vld [vmem:[#allocation4 + $0x88] sm:$0xff]
    %v77 = vld [vmem:[#allocation4 + $0x90] sm:$0xff]
    %v78 = vld [vmem:[#allocation4 + $0x98] sm:$0xff]
    %v79 = vld [vmem:[#allocation4 + $0xa0] sm:$0xff]
    %v80 = vld [vmem:[#allocation4 + $0xa8] sm:$0xff]
    %v81 = vld [vmem:[#allocation4 + $0xb0] sm:$0xff]
    %v82 = vld [vmem:[#allocation4 + $0xb8] sm:$0xff]
    %v83 = vld [vmem:[#allocation4 + $0xc0] sm:$0xff]
    %v84 = vld [vmem:[#allocation4 + $0xc8] sm:$0xff]
    %v85 = vld [vmem:[#allocation4 + $0xd0] sm:$0xff]
    %v86 = vld [vmem:[#allocation4 + $0xd8] sm:$0xff]
    %v87 = vld [vmem:[#allocation4 + $0xe0] sm:$0xff]
    %v88 = vld [vmem:[#allocation4 + $0xe8] sm:$0xff]
    %v89 = vld [vmem:[#allocation4 + $0xf0] sm:$0xff]
    %v90 = vld [vmem:[#allocation4 + $0xf8] sm:$0xff]
    %v91 = vadd.f32 %v59, %v60
    %92 = vadd.xlane.f32.xlu0 %v91
    %v93 = vpop.xlane.xlu0 %92
    %v94 = vadd.f32 %v61, %v62
    %95 = vadd.xlane.f32.xlu0 %v94
    %v96 = vpop.xlane.xlu0 %95
    %v97 = vadd.f32 %v63, %v64
    %98 = vadd.xlane.f32.xlu0 %v97
    %v99 = vpop.xlane.xlu0 %98
    %v100 = vadd.f32 %v65, %v66
    %101 = vadd.xlane.f32.xlu0 %v100
    %v102 = vpop.xlane.xlu0 %101
    %v103 = vadd.f32 %v67, %v68
    %104 = vadd.xlane.f32.xlu0 %v103
    %v105 = vpop.xlane.xlu0 %104
    %v106 = vadd.f32 %v69, %v70
    %107 = vadd.xlane.f32.xlu0 %v106
    %v108 = vpop.xlane.xlu0 %107
    %v109 = vadd.f32 %v71, %v72
    %110 = vadd.xlane.f32.xlu0 %v109
    %v111 = vpop.xlane.xlu0 %110
    %v112 = vadd.f32 %v73, %v74
    %113 = vadd.xlane.f32.xlu0 %v112
    %v114 = vpop.xlane.xlu0 %113
    %v115 = vadd.f32 %v75, %v76
    %116 = vadd.xlane.f32.xlu0 %v115
    %v117 = vpop.xlane.xlu0 %116
    %v118 = vadd.f32 %v77, %v78
    %119 = vadd.xlane.f32.xlu0 %v118
    %v120 = vpop.xlane.xlu0 %119
    %v121 = vadd.f32 %v79, %v80
    %122 = vadd.xlane.f32.xlu0 %v121
    %v123 = vpop.xlane.xlu0 %122
    %v124 = vadd.f32 %v81, %v82
    %125 = vadd.xlane.f32.xlu0 %v124
    %v126 = vpop.xlane.xlu0 %125
    %v127 = vadd.f32 %v83, %v84
    %128 = vadd.xlane.f32.xlu0 %v127
    %v129 = vpop.xlane.xlu0 %128
    %v130 = vadd.f32 %v85, %v86
    %131 = vadd.xlane.f32.xlu0 %v130
    %v132 = vpop.xlane.xlu0 %131
    %v133 = vadd.f32 %v87, %v88
    %134 = vadd.xlane.f32.xlu0 %v133
    %v135 = vpop.xlane.xlu0 %134
    %v136 = vadd.f32 %v89, %v90
    %137 = vadd.xlane.f32.xlu0 %v136
    %v138 = vpop.xlane.xlu0 %137
    %v139 = vrcp.pop 256.0
    %v140 = vmul.f32 %v93, %v139
    %v141 = vmul.f32 %v96, %v139
    %v142 = vmul.f32 %v99, %v139
    %v143 = vmul.f32 %v102, %v139
    %v144 = vmul.f32 %v105, %v139
    %v145 = vmul.f32 %v108, %v139
    %v146 = vmul.f32 %v111, %v139
    %v147 = vmul.f32 %v114, %v139
    %v148 = vmul.f32 %v117, %v139
    %v149 = vmul.f32 %v120, %v139
    %v150 = vmul.f32 %v123, %v139
    %v151 = vmul.f32 %v126, %v139
    %v152 = vmul.f32 %v129, %v139
    %v153 = vmul.f32 %v132, %v139
    %v154 = vmul.f32 %v135, %v139
    %v155 = vmul.f32 %v138, %v139
    %v156 = vmax.f32 %v59, %v61
    %v157 = vmax.f32 %v156, %v63
    %v158 = vmax.f32 %v157, %v65
    %v159 = vrot.slane %v158, 4
    %v160 = vmax.f32 %v158, %v159
    %v161 = vrot.slane %v160, 2
    %v162 = vmax.f32 %v160, %v161
    %v163 = vrot.slane %v162, 1
    %v164 = vmax.f32 %v162, %v163
    %v165 = vmax.f32 %v60, %v62
    %v166 = vmax.f32 %v165, %v64
    %v167 = vmax.f32 %v166, %v66
    %v168 = vrot.slane %v167, 4
    %v169 = vmax.f32 %v167, %v168
    %v170 = vrot.slane %v169, 2
    %v171 = vmax.f32 %v169, %v170
    %v172 = vrot.slane %v171, 1
    %v173 = vmax.f32 %v171, %v172
    %v174 = vmax.f32 %v67, %v69
    %v175 = vmax.f32 %v174, %v71
    %v176 = vmax.f32 %v175, %v73
    %v177 = vrot.slane %v176, 4
    %v178 = vmax.f32 %v176, %v177
    %v179 = vrot.slane %v178, 2
    %v180 = vmax.f32 %v178, %v179
    %v181 = vrot.slane %v180, 1
    %v182 = vmax.f32 %v180, %v181
    %v183 = vmax.f32 %v68, %v70
    %v184 = vmax.f32 %v183, %v72
    %v185 = vmax.f32 %v184, %v74
    %v186 = vrot.slane %v185, 4
    %v187 = vmax.f32 %v185, %v186
    %v188 = vrot.slane %v187, 2
    %v189 = vmax.f32 %v187, %v188
    %v190 = vrot.slane %v189, 1
    %v191 = vmax.f32 %v189, %v190
    %v192 = vmax.f32 %v75, %v77
    %v193 = vmax.f32 %v192, %v79
    %v194 = vmax.f32 %v193, %v81
    %v195 = vrot.slane %v194, 4
    %v196 = vmax.f32 %v194, %v195
    %v197 = vrot.slane %v196, 2
    %v198 = vmax.f32 %v196, %v197
    %v199 = vrot.slane %v198, 1
    %v200 = vmax.f32 %v198, %v199
    %v201 = vmax.f32 %v76, %v78
    %v202 = vmax.f32 %v201, %v80
    %v203 = vmax.f32 %v202, %v82
    %v204 = vrot.slane %v203, 4
    %v205 = vmax.f32 %v203, %v204
    %v206 = vrot.slane %v205, 2
    %v207 = vmax.f32 %v205, %v206
    %v208 = vrot.slane %v207, 1
    %v209 = vmax.f32 %v207, %v208
    %v210 = vmax.f32 %v83, %v85
    %v211 = vmax.f32 %v210, %v87
    %v212 = vmax.f32 %v211, %v89
    %v213 = vrot.slane %v212, 4
    %v214 = vmax.f32 %v212, %v213
    %v215 = vrot.slane %v214, 2
    %v216 = vmax.f32 %v214, %v215
    %v217 = vrot.slane %v216, 1
    %v218 = vmax.f32 %v216, %v217
    %v219 = vmax.f32 %v84, %v86
    %v220 = vmax.f32 %v219, %v88
    %v221 = vmax.f32 %v220, %v90
    %v222 = vrot.slane %v221, 4
    %v223 = vmax.f32 %v221, %v222
    %v224 = vrot.slane %v223, 2
    %v225 = vmax.f32 %v223, %v224
    %v226 = vrot.slane %v225, 1
    %v227 = vmax.f32 %v225, %v226
    %v228 = vld [vmem:[%s1] sm:$0xff]
    %v229 = vld [vmem:[%s1 + $0x8] sm:$0xff]
    %v230 = vld [vmem:[%s1 + $0x10] sm:$0xff]
    %v231 = vld [vmem:[%s1 + $0x18] sm:$0xff]
    %v232 = vld [vmem:[%s2] sm:$0x1]
    %v234 = vlaneseq
    %v235 = vshrl.u32 %v234, 7
    %v236 = vsub.s32 0, %v235
    %v237 = vrot.slane %v232, %v236
    %v255 = vlaneseq
    %v256 = vand.u32 %v255, 127
    %v257 = vlaneseq
    %v258 = vshrl.u32 %v257, 7
    %v259 = vsub.s32 %v256, %v258
    %v260 = vrot.slane %v140, %v259
    %v261 = vadd.s32 %v256, 4294967288
    %v262 = vlaneseq
    %v263 = vshrl.u32 %v262, 7
    %v264 = vsub.s32 %v261, %v263
    %v265 = vrot.slane %v141, %v264
    %vm266 = vcmask 130112
    %v267 = vsel %vm266, %v265, %v260
    %v268 = vadd.s32 %v256, 4294967280
    %v269 = vlaneseq
    %v270 = vshrl.u32 %v269, 7
    %v271 = vsub.s32 %v268, %v270
    %v272 = vrot.slane %v142, %v271
    %vm273 = vcmask 195712
    %v274 = vsel %vm273, %v272, %v267
    %v275 = vadd.s32 %v256, 4294967272
    %v276 = vlaneseq
    %v277 = vshrl.u32 %v276, 7
    %v278 = vsub.s32 %v275, %v277
    %v279 = vrot.slane %v143, %v278
    %vm280 = vcmask 261312
    %v281 = vsel %vm280, %v279, %v274
    %v282 = vlaneseq
    %v283 = vshrl.u32 %v282, 7
    %v284 = vsub.s32 %v256, %v283
    %v285 = vrot.slane %v144, %v284
    %v286 = vlaneseq
    %v287 = vshrl.u32 %v286, 7
    %v288 = vsub.s32 %v261, %v287
    %v289 = vrot.slane %v145, %v288
    %v290 = vsel %vm266, %v289, %v285
    %v291 = vlaneseq
    %v292 = vshrl.u32 %v291, 7
    %v293 = vsub.s32 %v268, %v292
    %v294 = vrot.slane %v146, %v293
    %v295 = vsel %vm273, %v294, %v290
    %v296 = vlaneseq
    %v297 = vshrl.u32 %v296, 7
    %v298 = vsub.s32 %v275, %v297
    %v299 = vrot.slane %v147, %v298
    %v300 = vsel %vm280, %v299, %v295
    %v301 = vlaneseq
    %v302 = vshrl.u32 %v301, 7
    %v303 = vsub.s32 %v256, %v302
    %v304 = vrot.slane %v148, %v303
    %v305 = vlaneseq
    %v306 = vshrl.u32 %v305, 7
    %v307 = vsub.s32 %v261, %v306
    %v308 = vrot.slane %v149, %v307
    %v309 = vsel %vm266, %v308, %v304
    %v310 = vlaneseq
    %v311 = vshrl.u32 %v310, 7
    %v312 = vsub.s32 %v268, %v311
    %v313 = vrot.slane %v150, %v312
    %v314 = vsel %vm273, %v313, %v309
    %v315 = vlaneseq
    %v316 = vshrl.u32 %v315, 7
    %v317 = vsub.s32 %v275, %v316
    %v318 = vrot.slane %v151, %v317
    %v319 = vsel %vm280, %v318, %v314
    %v320 = vlaneseq
    %v321 = vshrl.u32 %v320, 7
    %v322 = vsub.s32 %v256, %v321
    %v323 = vrot.slane %v152, %v322
    %v324 = vlaneseq
    %v325 = vshrl.u32 %v324, 7
    %v326 = vsub.s32 %v261, %v325
    %v327 = vrot.slane %v153, %v326
    %v328 = vsel %vm266, %v327, %v323
    %v329 = vlaneseq
    %v330 = vshrl.u32 %v329, 7
    %v331 = vsub.s32 %v268, %v330
    %v332 = vrot.slane %v154, %v331
    %v333 = vsel %vm273, %v332, %v328
    %v334 = vlaneseq
    %v335 = vshrl.u32 %v334, 7
    %v336 = vsub.s32 %v275, %v335
    %v337 = vrot.slane %v155, %v336
    %v338 = vsel %vm280, %v337, %v333
    %vm339 = vcmask 1041409
    %v340 = vsel %vm339, %v300, %v281
    %vm341 = vcmask 1042434
    %v342 = vsel %vm341, %v319, %v340
    %vm343 = vcmask 1043459
    %v344 = vsel %vm343, %v338, %v342
    %vm345 = vcmask 261120
    %v346 = vsel %vm345, %v344, 0
    %348 = vmatprep.subr.mxu0 0.0
    %349 = vmatpush1.msra.mxu0 %v228
    %350 = vmatprep.subr.mxu0 0.0
    %351 = vmatpush1.msra.mxu0 %v229
    %352 = vmatprep.subr.mxu0 0.0
    %353 = vmatpush1.msra.mxu0 %v230
    %354 = vmatprep.subr.mxu0 0.0
    %355 = vmatpush1.msra.mxu0 %v231
    %356 = vmatprep.subr.mxu0 0.0
    %357 = vmatpush1.msra.mxu0 0.0
    %358 = vmatprep.subr.mxu0 0.0
    %359 = vmatpush1.msra.mxu0 0.0
    %360 = vmatprep.subr.mxu0 0.0
    %361 = vmatpush1.msra.mxu0 0.0
    %362 = vmatprep.subr.mxu0 0.0
    %363 = vmatpush1.msra.mxu0 0.0
    %364 = vmatprep.subr.mxu0 0.0
    %365 = vmatpush1.msra.mxu0 0.0
    %366 = vmatprep.subr.mxu0 0.0
    %367 = vmatpush1.msra.mxu0 0.0
    %368 = vmatprep.subr.mxu0 0.0
    %369 = vmatpush1.msra.mxu0 0.0
    %370 = vmatprep.subr.mxu0 0.0
    %371 = vmatpush1.msra.mxu0 0.0
    %372 = vmatprep.subr.mxu0 0.0
    %373 = vmatpush1.msra.mxu0 0.0
    %374 = vmatprep.subr.mxu0 0.0
    %375 = vmatpush1.msra.mxu0 0.0
    %376 = vmatprep.subr.mxu0 0.0
    %377 = vmatpush1.msra.mxu0 0.0
    %378 = vmatprep.subr.mxu0 0.0
    %379 = vmatpush1.msra.mxu0 0.0
    %380 = vmatprep.subr.mxu0 0.0
    %381 = vmatpush1.msra.mxu0 0.0
    %382 = vmatprep.subr.mxu0 0.0
    %383 = vmatpush1.msra.mxu0 0.0
    %384 = vmatprep.subr.mxu0 0.0
    %385 = vmatpush1.msra.mxu0 0.0
    %386 = vmatprep.subr.mxu0 0.0
    %387 = vmatpush1.msra.mxu0 0.0
    %388 = vmatprep.subr.mxu0 0.0
    %389 = vmatpush1.msra.mxu0 0.0
    %390 = vmatprep.subr.mxu0 0.0
    %391 = vmatpush1.msra.mxu0 0.0
    %392 = vmatprep.subr.mxu0 0.0
    %393 = vmatpush1.msra.mxu0 0.0
    %394 = vmatprep.subr.mxu0 0.0
    %395 = vmatpush1.msra.mxu0 0.0
    %396 = vmatprep.subr.mxu0 0.0
    %397 = vmatpush1.msra.mxu0 0.0
    %398 = vmatprep.subr.mxu0 0.0
    %399 = vmatpush1.msra.mxu0 0.0
    %400 = vmatprep.subr.mxu0 0.0
    %401 = vmatpush1.msra.mxu0 0.0
    %402 = vmatprep.subr.mxu0 0.0
    %403 = vmatpush1.msra.mxu0 0.0
    %404 = vmatprep.subr.mxu0 0.0
    %405 = vmatpush1.msra.mxu0 0.0
    %406 = vmatprep.subr.mxu0 0.0
    %407 = vmatpush1.msra.mxu0 0.0
    %408 = vmatprep.subr.mxu0 0.0
    %409 = vmatpush1.msra.mxu0 0.0
    %410 = vmatprep.subr.mxu0 0.0
    %411 = vmatpush1.msra.mxu0 0.0
    %412 = vmatprep.mubr.f32.mxu0 0.0
    %413 = vmatmul.mubr.f32.gmra.mrb[0].mxu0 %v346
    %v414 = vpop.f32.mrb[0].mxu0
    %v415 = vadd.f32 %v237, %v414
    %v416 = vpop.f32.mrb[0].mxu0
    %417 = vdwg.mxu0
    %vm418 = vcmp.gt.f32.partialorder %v415, 0.0
    %v419 = vld [vmem:[%s3] sm:$0x1]
    %v421 = vlaneseq
    %v422 = vshrl.u32 %v421, 7
    %v423 = vsub.s32 0, %v422
    %v424 = vrot.slane %v419, %v423
    %v426 = vmul.f32 %v424, %v415
    %v427 = vsel %vm418, %v415, %v426
    %v428 = vld [vmem:[%s4] sm:$0x3]
    %v429 = vld [vmem:[%s5] sm:$0x1]
    %v431 = vlaneseq
    %v432 = vshrl.u32 %v431, 7
    %v433 = vsub.s32 0, %v432
    %v434 = vrot.slane %v429, %v433
    %vm436 = vcmask 15360
    %v438 = vsel %vm436, %v427, 0
    %vm440 = vcmask 1041408
    %v442 = vsel %vm440, %v428, 0
    %444 = vmatprep.subr.mxu0 0.0
    %445 = vmatpush1.msra.mxu0 %v442
    %446 = vmatprep.subr.mxu0 0.0
    %447 = vmatpush1.msra.mxu0 0.0
    %448 = vmatprep.subr.mxu0 0.0
    %449 = vmatpush1.msra.mxu0 0.0
    %450 = vmatprep.subr.mxu0 0.0
    %451 = vmatpush1.msra.mxu0 0.0
    %452 = vmatprep.subr.mxu0 0.0
    %453 = vmatpush1.msra.mxu0 0.0
    %454 = vmatprep.subr.mxu0 0.0
    %455 = vmatpush1.msra.mxu0 0.0
    %456 = vmatprep.subr.mxu0 0.0
    %457 = vmatpush1.msra.mxu0 0.0
    %458 = vmatprep.subr.mxu0 0.0
    %459 = vmatpush1.msra.mxu0 0.0
    %460 = vmatprep.subr.mxu0 0.0
    %461 = vmatpush1.msra.mxu0 0.0
    %462 = vmatprep.subr.mxu0 0.0
    %463 = vmatpush1.msra.mxu0 0.0
    %464 = vmatprep.subr.mxu0 0.0
    %465 = vmatpush1.msra.mxu0 0.0
    %466 = vmatprep.subr.mxu0 0.0
    %467 = vmatpush1.msra.mxu0 0.0
    %468 = vmatprep.subr.mxu0 0.0
    %469 = vmatpush1.msra.mxu0 0.0
    %470 = vmatprep.subr.mxu0 0.0
    %471 = vmatpush1.msra.mxu0 0.0
    %472 = vmatprep.subr.mxu0 0.0
    %473 = vmatpush1.msra.mxu0 0.0
    %474 = vmatprep.subr.mxu0 0.0
    %475 = vmatpush1.msra.mxu0 0.0
    %476 = vmatprep.subr.mxu0 0.0
    %477 = vmatpush1.msra.mxu0 0.0
    %478 = vmatprep.subr.mxu0 0.0
    %479 = vmatpush1.msra.mxu0 0.0
    %480 = vmatprep.subr.mxu0 0.0
    %481 = vmatpush1.msra.mxu0 0.0
    %482 = vmatprep.subr.mxu0 0.0
    %483 = vmatpush1.msra.mxu0 0.0
    %484 = vmatprep.subr.mxu0 0.0
    %485 = vmatpush1.msra.mxu0 0.0
    %486 = vmatprep.subr.mxu0 0.0
    %487 = vmatpush1.msra.mxu0 0.0
    %488 = vmatprep.subr.mxu0 0.0
    %489 = vmatpush1.msra.mxu0 0.0
    %490 = vmatprep.subr.mxu0 0.0
    %491 = vmatpush1.msra.mxu0 0.0
    %492 = vmatprep.subr.mxu0 0.0
    %493 = vmatpush1.msra.mxu0 0.0
    %494 = vmatprep.subr.mxu0 0.0
    %495 = vmatpush1.msra.mxu0 0.0
    %496 = vmatprep.subr.mxu0 0.0
    %497 = vmatpush1.msra.mxu0 0.0
    %498 = vmatprep.subr.mxu0 0.0
    %499 = vmatpush1.msra.mxu0 0.0
    %500 = vmatprep.subr.mxu0 0.0
    %501 = vmatpush1.msra.mxu0 0.0
    %502 = vmatprep.subr.mxu0 0.0
    %503 = vmatpush1.msra.mxu0 0.0
    %504 = vmatprep.subr.mxu0 0.0
    %505 = vmatpush1.msra.mxu0 0.0
    %506 = vmatprep.subr.mxu0 0.0
    %507 = vmatpush1.msra.mxu0 0.0
    %508 = vmatprep.mubr.f32.mxu0 0.0
    %509 = vmatmul.mubr.f32.gmra.mrb[0].mxu0 %v438
    %v510 = vpop.f32.mrb[0].mxu0
    %v511 = vadd.f32 %v434, %v510
    %v512 = vpop.f32.mrb[0].mxu0
    %513 = vdwg.mxu0
    %v514 = vxor.u32 %v511, 2147483648
    %v515 = vmul.f32 %v514, 1.442695
    %v516 = vpow.pop %v515
    %v517 = vadd.f32 %v516, 1.0
    %v518 = vrcp.pop %v517
    %v519 = vmul.f32 1.0, %v518
    %520 = vst [vmem:[#allocation2] sm:$0xf] 0.0
    %v529 = vcombine.low %v164, %v173
    %v530 = vcombine.low %v182, %v191
    %v531 = vcombine.low %v200, %v209
    %v532 = vcombine.low %v218, %v227
    %v533 = vrot.slane %v530, 7
    %v534 = vsel %vm339, %v533, %v529
    %vm535 = vcmask 1045509
    %v536 = vsel %vm535, %v533, %v534
    %v537 = vrot.slane %v531, 6
    %v538 = vsel %vm341, %v537, %v536
    %vm539 = vcmask 1046534
    %v540 = vsel %vm539, %v537, %v538
    %v541 = vrot.slane %v532, 5
    %v542 = vsel %vm343, %v541, %v540
    %vm543 = vcmask 1047559
    %v544 = vsel %vm543, %v541, %v542
    %546 = vst [vmem:[#allocation2 + $0x4] sm:$0xff] %v544
    %547 = vst [vmem:[#allocation2 + $0xc] sm:$0xf] 0.0
    %s548 = sld [smem:[#allocation3]]
    %v549 = vstv %s548
    %v550 = vld [vmem:[#allocation2] sm:$0xff]
    %v551 = vld [vmem:[#allocation2 + $0x8] sm:$0xf]
    %v552 = vld [vmem:[#allocation7] ss:$8 sm:$0x3]
    %v554 = vlaneseq
    %v555 = vshrl.u32 %v554, 7
    %v556 = vsub.s32 0, %v555
    %v557 = vrot.slane %v552, %v556
    %v558 = vlaneseq
    %v559 = vshrl.u32 %v558, 7
    %v560 = vsub.s32 1, %v559
    %v561 = vrot.slane %v552, %v560
    %v566 = vcombine.high %v550, %v550
    %567 = vrot.lane.b32.xlu0 %v550, 51
    %v568 = vpop.permute.xlu0 %567
    %569 = vrot.lane.b32.xlu0 %v566, 51
    %v570 = vpop.permute.xlu0 %569
    %571 = vrot.lane.b32.xlu0 %v551, 51
    %v572 = vpop.permute.xlu0 %571
    %vm573 = vcmask 416768
    %v574 = vsel %vm573, %v568, %v570
    %v575 = vsel %vm573, %v570, %v572
    %v578 = vmul.f32 %v557, %v574
    %v579 = vmul.f32 %v561, %v575
    %v580 = vadd.f32 %v549, %v578
    %v581 = vadd.f32 %v549, %v579
    %s582 = scalar_lea.vmem [#allocation7], 1
    %v583 = vld [vmem:[%s582] ss:$8 sm:$0x3]
    %v585 = vlaneseq
    %v586 = vshrl.u32 %v585, 7
    %v587 = vsub.s32 0, %v586
    %v588 = vrot.slane %v583, %v587
    %v589 = vlaneseq
    %v590 = vshrl.u32 %v589, 7
    %v591 = vsub.s32 1, %v590
    %v592 = vrot.slane %v583, %v591
    %595 = vrot.lane.b32.xlu0 %v550, 50
    %v596 = vpop.permute.xlu0 %595
    %597 = vrot.lane.b32.xlu0 %v566, 50
    %v598 = vpop.permute.xlu0 %597
    %599 = vrot.lane.b32.xlu0 %v551, 50
    %v600 = vpop.permute.xlu0 %599
    %vm601 = vcmask 408576
    %v602 = vsel %vm601, %v596, %v598
    %v603 = vsel %vm601, %v598, %v600
    %v606 = vmul.f32 %v588, %v602
    %v607 = vmul.f32 %v592, %v603
    %v608 = vadd.f32 %v580, %v606
    %v609 = vadd.f32 %v581, %v607
    %s610 = scalar_lea.vmem [#allocation7], 2
    %v611 = vld [vmem:[%s610] ss:$8 sm:$0x3]
    %v613 = vlaneseq
    %v614 = vshrl.u32 %v613, 7
    %v615 = vsub.s32 0, %v614
    %v616 = vrot.slane %v611, %v615
    %v617 = vlaneseq
    %v618 = vshrl.u32 %v617, 7
    %v619 = vsub.s32 1, %v618
    %v620 = vrot.slane %v611, %v619
    %623 = vrot.lane.b32.xlu0 %v550, 49
    %v624 = vpop.permute.xlu0 %623
    %625 = vrot.lane.b32.xlu0 %v566, 49
    %v626 = vpop.permute.xlu0 %625
    %627 = vrot.lane.b32.xlu0 %v551, 49
    %v628 = vpop.permute.xlu0 %627
    %vm629 = vcmask 400384
    %v630 = vsel %vm629, %v624, %v626
    %v631 = vsel %vm629, %v626, %v628
    %v634 = vmul.f32 %v616, %v630
    %v635 = vmul.f32 %v620, %v631
    %v636 = vadd.f32 %v608, %v634
    %v637 = vadd.f32 %v609, %v635
    %s638 = scalar_lea.vmem [#allocation7], 3
    %v639 = vld [vmem:[%s638] ss:$8 sm:$0x3]
    %v641 = vlaneseq
    %v642 = vshrl.u32 %v641, 7
    %v643 = vsub.s32 0, %v642
    %v644 = vrot.slane %v639, %v643
    %v645 = vlaneseq
    %v646 = vshrl.u32 %v645, 7
    %v647 = vsub.s32 1, %v646
    %v648 = vrot.slane %v639, %v647
    %651 = vrot.lane.b32.xlu0 %v550, 48
    %v652 = vpop.permute.xlu0 %651
    %653 = vrot.lane.b32.xlu0 %v566, 48
    %v654 = vpop.permute.xlu0 %653
    %655 = vrot.lane.b32.xlu0 %v551, 48
    %v656 = vpop.permute.xlu0 %655
    %vm657 = vcmask 392192
    %v658 = vsel %vm657, %v652, %v654
    %v659 = vsel %vm657, %v654, %v656
    %v662 = vmul.f32 %v644, %v658
    %v663 = vmul.f32 %v648, %v659
    %v664 = vadd.f32 %v636, %v662
    %v665 = vadd.f32 %v637, %v663
    %s666 = scalar_lea.vmem [#allocation7], 4
    %v667 = vld [vmem:[%s666] ss:$8 sm:$0x3]
    %v669 = vlaneseq
    %v670 = vshrl.u32 %v669, 7
    %v671 = vsub.s32 0, %v670
    %v672 = vrot.slane %v667, %v671
    %v673 = vlaneseq
    %v674 = vshrl.u32 %v673, 7
    %v675 = vsub.s32 1, %v674
    %v676 = vrot.slane %v667, %v675
    %679 = vrot.lane.b32.xlu0 %v550, 47
    %v680 = vpop.permute.xlu0 %679
    %681 = vrot.lane.b32.xlu0 %v566, 47
    %v682 = vpop.permute.xlu0 %681
    %683 = vrot.lane.b32.xlu0 %v551, 47
    %v684 = vpop.permute.xlu0 %683
    %vm685 = vcmask 384000
    %v686 = vsel %vm685, %v680, %v682
    %v687 = vsel %vm685, %v682, %v684
    %v690 = vmul.f32 %v672, %v686
    %v691 = vmul.f32 %v676, %v687
    %v692 = vadd.f32 %v664, %v690
    %v693 = vadd.f32 %v665, %v691
    %s694 = scalar_lea.vmem [#allocation7], 5
    %v695 = vld [vmem:[%s694] ss:$8 sm:$0x3]
    %v697 = vlaneseq
    %v698 = vshrl.u32 %v697, 7
    %v699 = vsub.s32 0, %v698
    %v700 = vrot.slane %v695, %v699
    %v701 = vlaneseq
    %v702 = vshrl.u32 %v701, 7
    %v703 = vsub.s32 1, %v702
    %v704 = vrot.slane %v695, %v703
    %707 = vrot.lane.b32.xlu0 %v550, 46
    %v708 = vpop.permute.xlu0 %707
    %709 = vrot.lane.b32.xlu0 %v566, 46
    %v710 = vpop.permute.xlu0 %709
    %711 = vrot.lane.b32.xlu0 %v551, 46
    %v712 = vpop.permute.xlu0 %711
    %vm713 = vcmask 375808
    %v714 = vsel %vm713, %v708, %v710
    %v715 = vsel %vm713, %v710, %v712
    %v718 = vmul.f32 %v700, %v714
    %v719 = vmul.f32 %v704, %v715
    %v720 = vadd.f32 %v692, %v718
    %v721 = vadd.f32 %v693, %v719
    %s722 = scalar_lea.vmem [#allocation7], 6
    %v723 = vld [vmem:[%s722] ss:$8 sm:$0x3]
    %v725 = vlaneseq
    %v726 = vshrl.u32 %v725, 7
    %v727 = vsub.s32 0, %v726
    %v728 = vrot.slane %v723, %v727
    %v729 = vlaneseq
    %v730 = vshrl.u32 %v729, 7
    %v731 = vsub.s32 1, %v730
    %v732 = vrot.slane %v723, %v731
    %735 = vrot.lane.b32.xlu0 %v550, 45
    %v736 = vpop.permute.xlu0 %735
    %737 = vrot.lane.b32.xlu0 %v566, 45
    %v738 = vpop.permute.xlu0 %737
    %739 = vrot.lane.b32.xlu0 %v551, 45
    %v740 = vpop.permute.xlu0 %739
    %vm741 = vcmask 367616
    %v742 = vsel %vm741, %v736, %v738
    %v743 = vsel %vm741, %v738, %v740
    %v746 = vmul.f32 %v728, %v742
    %v747 = vmul.f32 %v732, %v743
    %v748 = vadd.f32 %v720, %v746
    %v749 = vadd.f32 %v721, %v747
    %s750 = scalar_lea.vmem [#allocation7], 7
    %v751 = vld [vmem:[%s750] ss:$8 sm:$0x3]
    %v753 = vlaneseq
    %v754 = vshrl.u32 %v753, 7
    %v755 = vsub.s32 0, %v754
    %v756 = vrot.slane %v751, %v755
    %v757 = vlaneseq
    %v758 = vshrl.u32 %v757, 7
    %v759 = vsub.s32 1, %v758
    %v760 = vrot.slane %v751, %v759
    %763 = vrot.lane.b32.xlu0 %v550, 35
    %v764 = vpop.permute.xlu0 %763
    %765 = vrot.lane.b32.xlu0 %v566, 35
    %v766 = vpop.permute.xlu0 %765
    %767 = vrot.lane.b32.xlu0 %v551, 35
    %v768 = vpop.permute.xlu0 %767
    %vm769 = vcmask 285696
    %v770 = vsel %vm769, %v764, %v766
    %v771 = vsel %vm769, %v766, %v768
    %v774 = vmul.f32 %v756, %v770
    %v775 = vmul.f32 %v760, %v771
    %v776 = vadd.f32 %v748, %v774
    %v777 = vadd.f32 %v749, %v775
    %s778 = scalar_lea.vmem [#allocation7], 16
    %v779 = vld [vmem:[%s778] ss:$8 sm:$0x3]
    %v781 = vlaneseq
    %v782 = vshrl.u32 %v781, 7
    %v783 = vsub.s32 0, %v782
    %v784 = vrot.slane %v779, %v783
    %v785 = vlaneseq
    %v786 = vshrl.u32 %v785, 7
    %v787 = vsub.s32 1, %v786
    %v788 = vrot.slane %v779, %v787
    %791 = vrot.lane.b32.xlu0 %v550, 34
    %v792 = vpop.permute.xlu0 %791
    %793 = vrot.lane.b32.xlu0 %v566, 34
    %v794 = vpop.permute.xlu0 %793
    %795 = vrot.lane.b32.xlu0 %v551, 34
    %v796 = vpop.permute.xlu0 %795
    %vm797 = vcmask 277504
    %v798 = vsel %vm797, %v792, %v794
    %v799 = vsel %vm797, %v794, %v796
    %v802 = vmul.f32 %v784, %v798
    %v803 = vmul.f32 %v788, %v799
    %v804 = vadd.f32 %v776, %v802
    %v805 = vadd.f32 %v777, %v803
    %s806 = scalar_lea.vmem [#allocation7], 17
    %v807 = vld [vmem:[%s806] ss:$8 sm:$0x3]
    %v809 = vlaneseq
    %v810 = vshrl.u32 %v809, 7
    %v811 = vsub.s32 0, %v810
    %v812 = vrot.slane %v807, %v811
    %v813 = vlaneseq
    %v814 = vshrl.u32 %v813, 7
    %v815 = vsub.s32 1, %v814
    %v816 = vrot.slane %v807, %v815
    %819 = vrot.lane.b32.xlu0 %v550, 33
    %v820 = vpop.permute.xlu0 %819
    %821 = vrot.lane.b32.xlu0 %v566, 33
    %v822 = vpop.permute.xlu0 %821
    %823 = vrot.lane.b32.xlu0 %v551, 33
    %v824 = vpop.permute.xlu0 %823
    %vm825 = vcmask 269312
    %v826 = vsel %vm825, %v820, %v822
    %v827 = vsel %vm825, %v822, %v824
    %v830 = vmul.f32 %v812, %v826
    %v831 = vmul.f32 %v816, %v827
    %v832 = vadd.f32 %v804, %v830
    %v833 = vadd.f32 %v805, %v831
    %s834 = scalar_lea.vmem [#allocation7], 18
    %v835 = vld [vmem:[%s834] ss:$8 sm:$0x3]
    %v837 = vlaneseq
    %v838 = vshrl.u32 %v837, 7
    %v839 = vsub.s32 0, %v838
    %v840 = vrot.slane %v835, %v839
    %v841 = vlaneseq
    %v842 = vshrl.u32 %v841, 7
    %v843 = vsub.s32 1, %v842
    %v844 = vrot.slane %v835, %v843
    %847 = vrot.lane.b32.xlu0 %v550, 32
    %v848 = vpop.permute.xlu0 %847
    %849 = vrot.lane.b32.xlu0 %v566, 32
    %v850 = vpop.permute.xlu0 %849
    %851 = vrot.lane.b32.xlu0 %v551, 32
    %v852 = vpop.permute.xlu0 %851
    %v853 = vsel %vm345, %v848, %v850
    %v854 = vsel %vm345, %v850, %v852
    %v857 = vmul.f32 %v840, %v853
    %v858 = vmul.f32 %v844, %v854
    %v859 = vadd.f32 %v832, %v857
    %v860 = vadd.f32 %v833, %v858
    %s861 = scalar_lea.vmem [#allocation7], 19
    %v862 = vld [vmem:[%s861] ss:$8 sm:$0x3]
    %v864 = vlaneseq
    %v865 = vshrl.u32 %v864, 7
    %v866 = vsub.s32 0, %v865
    %v867 = vrot.slane %v862, %v866
    %v868 = vlaneseq
    %v869 = vshrl.u32 %v868, 7
    %v870 = vsub.s32 1, %v869
    %v871 = vrot.slane %v862, %v870
    %874 = vrot.lane.b32.xlu0 %v550, 31
    %v875 = vpop.permute.xlu0 %874
    %876 = vrot.lane.b32.xlu0 %v566, 31
    %v877 = vpop.permute.xlu0 %876
    %878 = vrot.lane.b32.xlu0 %v551, 31
    %v879 = vpop.permute.xlu0 %878
    %vm880 = vcmask 252928
    %v881 = vsel %vm880, %v875, %v877
    %v882 = vsel %vm880, %v877, %v879
    %v885 = vmul.f32 %v867, %v881
    %v886 = vmul.f32 %v871, %v882
    %v887 = vadd.f32 %v859, %v885
    %v888 = vadd.f32 %v860, %v886
    %s889 = scalar_lea.vmem [#allocation7], 20
    %v890 = vld [vmem:[%s889] ss:$8 sm:$0x3]
    %v892 = vlaneseq
    %v893 = vshrl.u32 %v892, 7
    %v894 = vsub.s32 0, %v893
    %v895 = vrot.slane %v890, %v894
    %v896 = vlaneseq
    %v897 = vshrl.u32 %v896, 7
    %v898 = vsub.s32 1, %v897
    %v899 = vrot.slane %v890, %v898
    %902 = vrot.lane.b32.xlu0 %v550, 30
    %v903 = vpop.permute.xlu0 %902
    %904 = vrot.lane.b32.xlu0 %v566, 30
    %v905 = vpop.permute.xlu0 %904
    %906 = vrot.lane.b32.xlu0 %v551, 30
    %v907 = vpop.permute.xlu0 %906
    %vm908 = vcmask 244736
    %v909 = vsel %vm908, %v903, %v905
    %v910 = vsel %vm908, %v905, %v907
    %v913 = vmul.f32 %v895, %v909
    %v914 = vmul.f32 %v899, %v910
    %v915 = vadd.f32 %v887, %v913
    %v916 = vadd.f32 %v888, %v914
    %s917 = scalar_lea.vmem [#allocation7], 21
    %v918 = vld [vmem:[%s917] ss:$8 sm:$0x3]
    %v920 = vlaneseq
    %v921 = vshrl.u32 %v920, 7
    %v922 = vsub.s32 0, %v921
    %v923 = vrot.slane %v918, %v922
    %v924 = vlaneseq
    %v925 = vshrl.u32 %v924, 7
    %v926 = vsub.s32 1, %v925
    %v927 = vrot.slane %v918, %v926
    %930 = vrot.lane.b32.xlu0 %v550, 29
    %v931 = vpop.permute.xlu0 %930
    %932 = vrot.lane.b32.xlu0 %v566, 29
    %v933 = vpop.permute.xlu0 %932
    %934 = vrot.lane.b32.xlu0 %v551, 29
    %v935 = vpop.permute.xlu0 %934
    %vm936 = vcmask 236544
    %v937 = vsel %vm936, %v931, %v933
    %v938 = vsel %vm936, %v933, %v935
    %v941 = vmul.f32 %v923, %v937
    %v942 = vmul.f32 %v927, %v938
    %v943 = vadd.f32 %v915, %v941
    %v944 = vadd.f32 %v916, %v942
    %s945 = scalar_lea.vmem [#allocation7], 22
    %v946 = vld [vmem:[%s945] ss:$8 sm:$0x3]
    %v948 = vlaneseq
    %v949 = vshrl.u32 %v948, 7
    %v950 = vsub.s32 0, %v949
    %v951 = vrot.slane %v946, %v950
    %v952 = vlaneseq
    %v953 = vshrl.u32 %v952, 7
    %v954 = vsub.s32 1, %v953
    %v955 = vrot.slane %v946, %v954
    %958 = vrot.lane.b32.xlu0 %v550, 19
    %v959 = vpop.permute.xlu0 %958
    %960 = vrot.lane.b32.xlu0 %v566, 19
    %v961 = vpop.permute.xlu0 %960
    %962 = vrot.lane.b32.xlu0 %v551, 19
    %v963 = vpop.permute.xlu0 %962
    %vm964 = vcmask 154624
    %v965 = vsel %vm964, %v959, %v961
    %v966 = vsel %vm964, %v961, %v963
    %v969 = vmul.f32 %v951, %v965
    %v970 = vmul.f32 %v955, %v966
    %v971 = vadd.f32 %v943, %v969
    %v972 = vadd.f32 %v944, %v970
    %s973 = scalar_lea.vmem [#allocation7], 23
    %v974 = vld [vmem:[%s973] ss:$8 sm:$0x3]
    %v976 = vlaneseq
    %v977 = vshrl.u32 %v976, 7
    %v978 = vsub.s32 0, %v977
    %v979 = vrot.slane %v974, %v978
    %v980 = vlaneseq
    %v981 = vshrl.u32 %v980, 7
    %v982 = vsub.s32 1, %v981
    %v983 = vrot.slane %v974, %v982
    %986 = vrot.lane.b32.xlu0 %v550, 18
    %v987 = vpop.permute.xlu0 %986
    %988 = vrot.lane.b32.xlu0 %v566, 18
    %v989 = vpop.permute.xlu0 %988
    %990 = vrot.lane.b32.xlu0 %v551, 18
    %v991 = vpop.permute.xlu0 %990
    %vm992 = vcmask 146432
    %v993 = vsel %vm992, %v987, %v989
    %v994 = vsel %vm992, %v989, %v991
    %v997 = vmul.f32 %v979, %v993
    %v998 = vmul.f32 %v983, %v994
    %v999 = vadd.f32 %v971, %v997
    %v1000 = vadd.f32 %v972, %v998
    %s1001 = scalar_lea.vmem [#allocation7], 32
    %v1002 = vld [vmem:[%s1001] ss:$8 sm:$0x3]
    %v1004 = vlaneseq
    %v1005 = vshrl.u32 %v1004, 7
    %v1006 = vsub.s32 0, %v1005
    %v1007 = vrot.slane %v1002, %v1006
    %v1008 = vlaneseq
    %v1009 = vshrl.u32 %v1008, 7
    %v1010 = vsub.s32 1, %v1009
    %v1011 = vrot.slane %v1002, %v1010
    %1014 = vrot.lane.b32.xlu0 %v550, 17
    %v1015 = vpop.permute.xlu0 %1014
    %1016 = vrot.lane.b32.xlu0 %v566, 17
    %v1017 = vpop.permute.xlu0 %1016
    %1018 = vrot.lane.b32.xlu0 %v551, 17
    %v1019 = vpop.permute.xlu0 %1018
    %vm1020 = vcmask 138240
    %v1021 = vsel %vm1020, %v1015, %v1017
    %v1022 = vsel %vm1020, %v1017, %v1019
    %v1025 = vmul.f32 %v1007, %v1021
    %v1026 = vmul.f32 %v1011, %v1022
    %v1027 = vadd.f32 %v999, %v1025
    %v1028 = vadd.f32 %v1000, %v1026
    %s1029 = scalar_lea.vmem [#allocation7], 33
    %v1030 = vld [vmem:[%s1029] ss:$8 sm:$0x3]
    %v1032 = vlaneseq
    %v1033 = vshrl.u32 %v1032, 7
    %v1034 = vsub.s32 0, %v1033
    %v1035 = vrot.slane %v1030, %v1034
    %v1036 = vlaneseq
    %v1037 = vshrl.u32 %v1036, 7
    %v1038 = vsub.s32 1, %v1037
    %v1039 = vrot.slane %v1030, %v1038
    %1042 = vrot.lane.b32.xlu0 %v550, 16
    %v1043 = vpop.permute.xlu0 %1042
    %1044 = vrot.lane.b32.xlu0 %v566, 16
    %v1045 = vpop.permute.xlu0 %1044
    %1046 = vrot.lane.b32.xlu0 %v551, 16
    %v1047 = vpop.permute.xlu0 %1046
    %vm1048 = vcmask 130048
    %v1049 = vsel %vm1048, %v1043, %v1045
    %v1050 = vsel %vm1048, %v1045, %v1047
    %v1053 = vmul.f32 %v1035, %v1049
    %v1054 = vmul.f32 %v1039, %v1050
    %v1055 = vadd.f32 %v1027, %v1053
    %v1056 = vadd.f32 %v1028, %v1054
    %s1057 = scalar_lea.vmem [#allocation7], 34
    %v1058 = vld [vmem:[%s1057] ss:$8 sm:$0x3]
    %v1060 = vlaneseq
    %v1061 = vshrl.u32 %v1060, 7
    %v1062 = vsub.s32 0, %v1061
    %v1063 = vrot.slane %v1058, %v1062
    %v1064 = vlaneseq
    %v1065 = vshrl.u32 %v1064, 7
    %v1066 = vsub.s32 1, %v1065
    %v1067 = vrot.slane %v1058, %v1066
    %1070 = vrot.lane.b32.xlu0 %v550, 15
    %v1071 = vpop.permute.xlu0 %1070
    %1072 = vrot.lane.b32.xlu0 %v566, 15
    %v1073 = vpop.permute.xlu0 %1072
    %1074 = vrot.lane.b32.xlu0 %v551, 15
    %v1075 = vpop.permute.xlu0 %1074
    %vm1076 = vcmask 121856
    %v1077 = vsel %vm1076, %v1071, %v1073
    %v1078 = vsel %vm1076, %v1073, %v1075
    %v1081 = vmul.f32 %v1063, %v1077
    %v1082 = vmul.f32 %v1067, %v1078
    %v1083 = vadd.f32 %v1055, %v1081
    %v1084 = vadd.f32 %v1056, %v1082
    %s1085 = scalar_lea.vmem [#allocation7], 35
    %v1086 = vld [vmem:[%s1085] ss:$8 sm:$0x3]
    %v1088 = vlaneseq
    %v1089 = vshrl.u32 %v1088, 7
    %v1090 = vsub.s32 0, %v1089
    %v1091 = vrot.slane %v1086, %v1090
    %v1092 = vlaneseq
    %v1093 = vshrl.u32 %v1092, 7
    %v1094 = vsub.s32 1, %v1093
    %v1095 = vrot.slane %v1086, %v1094
    %1098 = vrot.lane.b32.xlu0 %v550, 14
    %v1099 = vpop.permute.xlu0 %1098
    %1100 = vrot.lane.b32.xlu0 %v566, 14
    %v1101 = vpop.permute.xlu0 %1100
    %1102 = vrot.lane.b32.xlu0 %v551, 14
    %v1103 = vpop.permute.xlu0 %1102
    %vm1104 = vcmask 113664
    %v1105 = vsel %vm1104, %v1099, %v1101
    %v1106 = vsel %vm1104, %v1101, %v1103
    %v1109 = vmul.f32 %v1091, %v1105
    %v1110 = vmul.f32 %v1095, %v1106
    %v1111 = vadd.f32 %v1083, %v1109
    %v1112 = vadd.f32 %v1084, %v1110
    %s1113 = scalar_lea.vmem [#allocation7], 36
    %v1114 = vld [vmem:[%s1113] ss:$8 sm:$0x3]
    %v1116 = vlaneseq
    %v1117 = vshrl.u32 %v1116, 7
    %v1118 = vsub.s32 0, %v1117
    %v1119 = vrot.slane %v1114, %v1118
    %v1120 = vlaneseq
    %v1121 = vshrl.u32 %v1120, 7
    %v1122 = vsub.s32 1, %v1121
    %v1123 = vrot.slane %v1114, %v1122
    %1126 = vrot.lane.b32.xlu0 %v550, 13
    %v1127 = vpop.permute.xlu0 %1126
    %1128 = vrot.lane.b32.xlu0 %v566, 13
    %v1129 = vpop.permute.xlu0 %1128
    %1130 = vrot.lane.b32.xlu0 %v551, 13
    %v1131 = vpop.permute.xlu0 %1130
    %vm1132 = vcmask 105472
    %v1133 = vsel %vm1132, %v1127, %v1129
    %v1134 = vsel %vm1132, %v1129, %v1131
    %v1137 = vmul.f32 %v1119, %v1133
    %v1138 = vmul.f32 %v1123, %v1134
    %v1139 = vadd.f32 %v1111, %v1137
    %v1140 = vadd.f32 %v1112, %v1138
    %s1141 = scalar_lea.vmem [#allocation7], 37
    %v1142 = vld [vmem:[%s1141] ss:$8 sm:$0x3]
    %v1144 = vlaneseq
    %v1145 = vshrl.u32 %v1144, 7
    %v1146 = vsub.s32 0, %v1145
    %v1147 = vrot.slane %v1142, %v1146
    %v1148 = vlaneseq
    %v1149 = vshrl.u32 %v1148, 7
    %v1150 = vsub.s32 1, %v1149
    %v1151 = vrot.slane %v1142, %v1150
    %1154 = vrot.lane.b32.xlu0 %v550, 3
    %v1155 = vpop.permute.xlu0 %1154
    %1156 = vrot.lane.b32.xlu0 %v566, 3
    %v1157 = vpop.permute.xlu0 %1156
    %1158 = vrot.lane.b32.xlu0 %v551, 3
    %v1159 = vpop.permute.xlu0 %1158
    %vm1160 = vcmask 23552
    %v1161 = vsel %vm1160, %v1155, %v1157
    %v1162 = vsel %vm1160, %v1157, %v1159
    %v1165 = vmul.f32 %v1147, %v1161
    %v1166 = vmul.f32 %v1151, %v1162
    %v1167 = vadd.f32 %v1139, %v1165
    %v1168 = vadd.f32 %v1140, %v1166
    %s1169 = scalar_lea.vmem [#allocation7], 38
    %v1170 = vld [vmem:[%s1169] ss:$8 sm:$0x3]
    %v1172 = vlaneseq
    %v1173 = vshrl.u32 %v1172, 7
    %v1174 = vsub.s32 0, %v1173
    %v1175 = vrot.slane %v1170, %v1174
    %v1176 = vlaneseq
    %v1177 = vshrl.u32 %v1176, 7
    %v1178 = vsub.s32 1, %v1177
    %v1179 = vrot.slane %v1170, %v1178
    %1182 = vrot.lane.b32.xlu0 %v550, 2
    %v1183 = vpop.permute.xlu0 %1182
    %1184 = vrot.lane.b32.xlu0 %v566, 2
    %v1185 = vpop.permute.xlu0 %1184
    %1186 = vrot.lane.b32.xlu0 %v551, 2
    %v1187 = vpop.permute.xlu0 %1186
    %v1188 = vsel %vm436, %v1183, %v1185
    %v1189 = vsel %vm436, %v1185, %v1187
    %v1192 = vmul.f32 %v1175, %v1188
    %v1193 = vmul.f32 %v1179, %v1189
    %v1194 = vadd.f32 %v1167, %v1192
    %v1195 = vadd.f32 %v1168, %v1193
    %s1196 = scalar_lea.vmem [#allocation7], 39
    %v1197 = vld [vmem:[%s1196] ss:$8 sm:$0x3]
    %v1199 = vlaneseq
    %v1200 = vshrl.u32 %v1199, 7
    %v1201 = vsub.s32 0, %v1200
    %v1202 = vrot.slane %v1197, %v1201
    %v1203 = vlaneseq
    %v1204 = vshrl.u32 %v1203, 7
    %v1205 = vsub.s32 1, %v1204
    %v1206 = vrot.slane %v1197, %v1205
    %1209 = vrot.lane.b32.xlu0 %v550, 1
    %v1210 = vpop.permute.xlu0 %1209
    %1211 = vrot.lane.b32.xlu0 %v566, 1
    %v1212 = vpop.permute.xlu0 %1211
    %1213 = vrot.lane.b32.xlu0 %v551, 1
    %v1214 = vpop.permute.xlu0 %1213
    %vm1215 = vcmask 7168
    %v1216 = vsel %vm1215, %v1210, %v1212
    %v1217 = vsel %vm1215, %v1212, %v1214
    %v1220 = vmul.f32 %v1202, %v1216
    %v1221 = vmul.f32 %v1206, %v1217
    %v1222 = vadd.f32 %v1194, %v1220
    %v1223 = vadd.f32 %v1195, %v1221
    %v1224 = vld [vmem:[#allocation2 + $0x4] sm:$0xff]
    %s1225 = scalar_lea.vmem [#allocation7], 48
    %v1226 = vld [vmem:[%s1225] ss:$8 sm:$0x3]
    %v1228 = vlaneseq
    %v1229 = vshrl.u32 %v1228, 7
    %v1230 = vsub.s32 0, %v1229
    %v1231 = vrot.slane %v1226, %v1230
    %v1232 = vlaneseq
    %v1233 = vshrl.u32 %v1232, 7
    %v1234 = vsub.s32 1, %v1233
    %v1235 = vrot.slane %v1226, %v1234
    %v1239 = vcombine.high %v1224, %v1224
    %v1241 = vmul.f32 %v1231, %v1224
    %v1242 = vmul.f32 %v1235, %v1239
    %v1243 = vadd.f32 %v1222, %v1241
    %v1244 = vadd.f32 %v1223, %v1242
    %v1245 = vld [vmem:[#allocation2 + $0x4] sm:$0xff]
    %v1246 = vld [vmem:[#allocation2 + $0xc] sm:$0xf]
    %s1247 = scalar_lea.vmem [#allocation7], 49
    %v1248 = vld [vmem:[%s1247] ss:$8 sm:$0x3]
    %v1250 = vlaneseq
    %v1251 = vshrl.u32 %v1250, 7
    %v1252 = vsub.s32 0, %v1251
    %v1253 = vrot.slane %v1248, %v1252
    %v1254 = vlaneseq
    %v1255 = vshrl.u32 %v1254, 7
    %v1256 = vsub.s32 1, %v1255
    %v1257 = vrot.slane %v1248, %v1256
    %v1262 = vcombine.high %v1245, %v1245
    %1263 = vrot.lane.b32.xlu0 %v1245, 127
    %v1264 = vpop.permute.xlu0 %1263
    %1265 = vrot.lane.b32.xlu0 %v1262, 127
    %v1266 = vpop.permute.xlu0 %1265
    %1267 = vrot.lane.b32.xlu0 %v1246, 127
    %v1268 = vpop.permute.xlu0 %1267
    %vm1269 = vcmask 1039360
    %v1270 = vsel %vm1269, %v1264, %v1266
    %v1271 = vsel %vm1269, %v1266, %v1268
    %v1274 = vmul.f32 %v1253, %v1270
    %v1275 = vmul.f32 %v1257, %v1271
    %v1276 = vadd.f32 %v1243, %v1274
    %v1277 = vadd.f32 %v1244, %v1275
    %s1278 = scalar_lea.vmem [#allocation7], 50
    %v1279 = vld [vmem:[%s1278] ss:$8 sm:$0x3]
    %v1281 = vlaneseq
    %v1282 = vshrl.u32 %v1281, 7
    %v1283 = vsub.s32 0, %v1282
    %v1284 = vrot.slane %v1279, %v1283
    %v1285 = vlaneseq
    %v1286 = vshrl.u32 %v1285, 7
    %v1287 = vsub.s32 1, %v1286
    %v1288 = vrot.slane %v1279, %v1287
    %1291 = vrot.lane.b32.xlu0 %v1245, 126
    %v1292 = vpop.permute.xlu0 %1291
    %1293 = vrot.lane.b32.xlu0 %v1262, 126
    %v1294 = vpop.permute.xlu0 %1293
    %1295 = vrot.lane.b32.xlu0 %v1246, 126
    %v1296 = vpop.permute.xlu0 %1295
    %vm1297 = vcmask 1031168
    %v1298 = vsel %vm1297, %v1292, %v1294
    %v1299 = vsel %vm1297, %v1294, %v1296
    %v1302 = vmul.f32 %v1284, %v1298
    %v1303 = vmul.f32 %v1288, %v1299
    %v1304 = vadd.f32 %v1276, %v1302
    %v1305 = vadd.f32 %v1277, %v1303
    %s1306 = scalar_lea.vmem [#allocation7], 51
    %v1307 = vld [vmem:[%s1306] ss:$8 sm:$0x3]
    %v1309 = vlaneseq
    %v1310 = vshrl.u32 %v1309, 7
    %v1311 = vsub.s32 0, %v1310
    %v1312 = vrot.slane %v1307, %v1311
    %v1313 = vlaneseq
    %v1314 = vshrl.u32 %v1313, 7
    %v1315 = vsub.s32 1, %v1314
    %v1316 = vrot.slane %v1307, %v1315
    %1319 = vrot.lane.b32.xlu0 %v1245, 125
    %v1320 = vpop.permute.xlu0 %1319
    %1321 = vrot.lane.b32.xlu0 %v1262, 125
    %v1322 = vpop.permute.xlu0 %1321
    %1323 = vrot.lane.b32.xlu0 %v1246, 125
    %v1324 = vpop.permute.xlu0 %1323
    %vm1325 = vcmask 1022976
    %v1326 = vsel %vm1325, %v1320, %v1322
    %v1327 = vsel %vm1325, %v1322, %v1324
    %v1330 = vmul.f32 %v1312, %v1326
    %v1331 = vmul.f32 %v1316, %v1327
    %v1332 = vadd.f32 %v1304, %v1330
    %v1333 = vadd.f32 %v1305, %v1331
    %s1334 = scalar_lea.vmem [#allocation7], 52
    %v1335 = vld [vmem:[%s1334] ss:$8 sm:$0x3]
    %v1337 = vlaneseq
    %v1338 = vshrl.u32 %v1337, 7
    %v1339 = vsub.s32 0, %v1338
    %v1340 = vrot.slane %v1335, %v1339
    %v1341 = vlaneseq
    %v1342 = vshrl.u32 %v1341, 7
    %v1343 = vsub.s32 1, %v1342
    %v1344 = vrot.slane %v1335, %v1343
    %1347 = vrot.lane.b32.xlu0 %v1245, 115
    %v1348 = vpop.permute.xlu0 %1347
    %1349 = vrot.lane.b32.xlu0 %v1262, 115
    %v1350 = vpop.permute.xlu0 %1349
    %1351 = vrot.lane.b32.xlu0 %v1246, 115
    %v1352 = vpop.permute.xlu0 %1351
    %vm1353 = vcmask 941056
    %v1354 = vsel %vm1353, %v1348, %v1350
    %v1355 = vsel %vm1353, %v1350, %v1352
    %v1358 = vmul.f32 %v1340, %v1354
    %v1359 = vmul.f32 %v1344, %v1355
    %v1360 = vadd.f32 %v1332, %v1358
    %v1361 = vadd.f32 %v1333, %v1359
    %s1362 = scalar_lea.vmem [#allocation7], 53
    %v1363 = vld [vmem:[%s1362] ss:$8 sm:$0x3]
    %v1365 = vlaneseq
    %v1366 = vshrl.u32 %v1365, 7
    %v1367 = vsub.s32 0, %v1366
    %v1368 = vrot.slane %v1363, %v1367
    %v1369 = vlaneseq
    %v1370 = vshrl.u32 %v1369, 7
    %v1371 = vsub.s32 1, %v1370
    %v1372 = vrot.slane %v1363, %v1371
    %1375 = vrot.lane.b32.xlu0 %v1245, 114
    %v1376 = vpop.permute.xlu0 %1375
    %1377 = vrot.lane.b32.xlu0 %v1262, 114
    %v1378 = vpop.permute.xlu0 %1377
    %1379 = vrot.lane.b32.xlu0 %v1246, 114
    %v1380 = vpop.permute.xlu0 %1379
    %vm1381 = vcmask 932864
    %v1382 = vsel %vm1381, %v1376, %v1378
    %v1383 = vsel %vm1381, %v1378, %v1380
    %v1386 = vmul.f32 %v1368, %v1382
    %v1387 = vmul.f32 %v1372, %v1383
    %v1388 = vadd.f32 %v1360, %v1386
    %v1389 = vadd.f32 %v1361, %v1387
    %s1390 = scalar_lea.vmem [#allocation7], 54
    %v1391 = vld [vmem:[%s1390] ss:$8 sm:$0x3]
    %v1393 = vlaneseq
    %v1394 = vshrl.u32 %v1393, 7
    %v1395 = vsub.s32 0, %v1394
    %v1396 = vrot.slane %v1391, %v1395
    %v1397 = vlaneseq
    %v1398 = vshrl.u32 %v1397, 7
    %v1399 = vsub.s32 1, %v1398
    %v1400 = vrot.slane %v1391, %v1399
    %1403 = vrot.lane.b32.xlu0 %v1245, 113
    %v1404 = vpop.permute.xlu0 %1403
    %1405 = vrot.lane.b32.xlu0 %v1262, 113
    %v1406 = vpop.permute.xlu0 %1405
    %1407 = vrot.lane.b32.xlu0 %v1246, 113
    %v1408 = vpop.permute.xlu0 %1407
    %vm1409 = vcmask 924672
    %v1410 = vsel %vm1409, %v1404, %v1406
    %v1411 = vsel %vm1409, %v1406, %v1408
    %v1414 = vmul.f32 %v1396, %v1410
    %v1415 = vmul.f32 %v1400, %v1411
    %v1416 = vadd.f32 %v1388, %v1414
    %v1417 = vadd.f32 %v1389, %v1415
    %s1418 = scalar_lea.vmem [#allocation7], 55
    %v1419 = vld [vmem:[%s1418] ss:$8 sm:$0x3]
    %v1421 = vlaneseq
    %v1422 = vshrl.u32 %v1421, 7
    %v1423 = vsub.s32 0, %v1422
    %v1424 = vrot.slane %v1419, %v1423
    %v1425 = vlaneseq
    %v1426 = vshrl.u32 %v1425, 7
    %v1427 = vsub.s32 1, %v1426
    %v1428 = vrot.slane %v1419, %v1427
    %1431 = vrot.lane.b32.xlu0 %v1245, 112
    %v1432 = vpop.permute.xlu0 %1431
    %1433 = vrot.lane.b32.xlu0 %v1262, 112
    %v1434 = vpop.permute.xlu0 %1433
    %1435 = vrot.lane.b32.xlu0 %v1246, 112
    %v1436 = vpop.permute.xlu0 %1435
    %vm1437 = vcmask 916480
    %v1438 = vsel %vm1437, %v1432, %v1434
    %v1439 = vsel %vm1437, %v1434, %v1436
    %v1442 = vmul.f32 %v1424, %v1438
    %v1443 = vmul.f32 %v1428, %v1439
    %v1444 = vadd.f32 %v1416, %v1442
    %v1445 = vadd.f32 %v1417, %v1443
    %s1446 = scalar_lea.vmem [#allocation7], 64
    %v1447 = vld [vmem:[%s1446] ss:$8 sm:$0x3]
    %v1449 = vlaneseq
    %v1450 = vshrl.u32 %v1449, 7
    %v1451 = vsub.s32 0, %v1450
    %v1452 = vrot.slane %v1447, %v1451
    %v1453 = vlaneseq
    %v1454 = vshrl.u32 %v1453, 7
    %v1455 = vsub.s32 1, %v1454
    %v1456 = vrot.slane %v1447, %v1455
    %1459 = vrot.lane.b32.xlu0 %v1245, 111
    %v1460 = vpop.permute.xlu0 %1459
    %1461 = vrot.lane.b32.xlu0 %v1262, 111
    %v1462 = vpop.permute.xlu0 %1461
    %1463 = vrot.lane.b32.xlu0 %v1246, 111
    %v1464 = vpop.permute.xlu0 %1463
    %vm1465 = vcmask 908288
    %v1466 = vsel %vm1465, %v1460, %v1462
    %v1467 = vsel %vm1465, %v1462, %v1464
    %v1470 = vmul.f32 %v1452, %v1466
    %v1471 = vmul.f32 %v1456, %v1467
    %v1472 = vadd.f32 %v1444, %v1470
    %v1473 = vadd.f32 %v1445, %v1471
    %s1474 = scalar_lea.vmem [#allocation7], 65
    %v1475 = vld [vmem:[%s1474] ss:$8 sm:$0x3]
    %v1477 = vlaneseq
    %v1478 = vshrl.u32 %v1477, 7
    %v1479 = vsub.s32 0, %v1478
    %v1480 = vrot.slane %v1475, %v1479
    %v1481 = vlaneseq
    %v1482 = vshrl.u32 %v1481, 7
    %v1483 = vsub.s32 1, %v1482
    %v1484 = vrot.slane %v1475, %v1483
    %1487 = vrot.lane.b32.xlu0 %v1245, 110
    %v1488 = vpop.permute.xlu0 %1487
    %1489 = vrot.lane.b32.xlu0 %v1262, 110
    %v1490 = vpop.permute.xlu0 %1489
    %1491 = vrot.lane.b32.xlu0 %v1246, 110
    %v1492 = vpop.permute.xlu0 %1491
    %vm1493 = vcmask 900096
    %v1494 = vsel %vm1493, %v1488, %v1490
    %v1495 = vsel %vm1493, %v1490, %v1492
    %v1498 = vmul.f32 %v1480, %v1494
    %v1499 = vmul.f32 %v1484, %v1495
    %v1500 = vadd.f32 %v1472, %v1498
    %v1501 = vadd.f32 %v1473, %v1499
    %s1502 = scalar_lea.vmem [#allocation7], 66
    %v1503 = vld [vmem:[%s1502] ss:$8 sm:$0x3]
    %v1505 = vlaneseq
    %v1506 = vshrl.u32 %v1505, 7
    %v1507 = vsub.s32 0, %v1506
    %v1508 = vrot.slane %v1503, %v1507
    %v1509 = vlaneseq
    %v1510 = vshrl.u32 %v1509, 7
    %v1511 = vsub.s32 1, %v1510
    %v1512 = vrot.slane %v1503, %v1511
    %1515 = vrot.lane.b32.xlu0 %v1245, 109
    %v1516 = vpop.permute.xlu0 %1515
    %1517 = vrot.lane.b32.xlu0 %v1262, 109
    %v1518 = vpop.permute.xlu0 %1517
    %1519 = vrot.lane.b32.xlu0 %v1246, 109
    %v1520 = vpop.permute.xlu0 %1519
    %vm1521 = vcmask 891904
    %v1522 = vsel %vm1521, %v1516, %v1518
    %v1523 = vsel %vm1521, %v1518, %v1520
    %v1526 = vmul.f32 %v1508, %v1522
    %v1527 = vmul.f32 %v1512, %v1523
    %v1528 = vadd.f32 %v1500, %v1526
    %v1529 = vadd.f32 %v1501, %v1527
    %s1530 = scalar_lea.vmem [#allocation7], 67
    %v1531 = vld [vmem:[%s1530] ss:$8 sm:$0x3]
    %v1533 = vlaneseq
    %v1534 = vshrl.u32 %v1533, 7
    %v1535 = vsub.s32 0, %v1534
    %v1536 = vrot.slane %v1531, %v1535
    %v1537 = vlaneseq
    %v1538 = vshrl.u32 %v1537, 7
    %v1539 = vsub.s32 1, %v1538
    %v1540 = vrot.slane %v1531, %v1539
    %1543 = vrot.lane.b32.xlu0 %v1245, 99
    %v1544 = vpop.permute.xlu0 %1543
    %1545 = vrot.lane.b32.xlu0 %v1262, 99
    %v1546 = vpop.permute.xlu0 %1545
    %1547 = vrot.lane.b32.xlu0 %v1246, 99
    %v1548 = vpop.permute.xlu0 %1547
    %vm1549 = vcmask 809984
    %v1550 = vsel %vm1549, %v1544, %v1546
    %v1551 = vsel %vm1549, %v1546, %v1548
    %v1554 = vmul.f32 %v1536, %v1550
    %v1555 = vmul.f32 %v1540, %v1551
    %v1556 = vadd.f32 %v1528, %v1554
    %v1557 = vadd.f32 %v1529, %v1555
    %s1558 = scalar_lea.vmem [#allocation7], 68
    %v1559 = vld [vmem:[%s1558] ss:$8 sm:$0x3]
    %v1561 = vlaneseq
    %v1562 = vshrl.u32 %v1561, 7
    %v1563 = vsub.s32 0, %v1562
    %v1564 = vrot.slane %v1559, %v1563
    %v1565 = vlaneseq
    %v1566 = vshrl.u32 %v1565, 7
    %v1567 = vsub.s32 1, %v1566
    %v1568 = vrot.slane %v1559, %v1567
    %1571 = vrot.lane.b32.xlu0 %v1245, 98
    %v1572 = vpop.permute.xlu0 %1571
    %1573 = vrot.lane.b32.xlu0 %v1262, 98
    %v1574 = vpop.permute.xlu0 %1573
    %1575 = vrot.lane.b32.xlu0 %v1246, 98
    %v1576 = vpop.permute.xlu0 %1575
    %vm1577 = vcmask 801792
    %v1578 = vsel %vm1577, %v1572, %v1574
    %v1579 = vsel %vm1577, %v1574, %v1576
    %v1582 = vmul.f32 %v1564, %v1578
    %v1583 = vmul.f32 %v1568, %v1579
    %v1584 = vadd.f32 %v1556, %v1582
    %v1585 = vadd.f32 %v1557, %v1583
    %s1586 = scalar_lea.vmem [#allocation7], 69
    %v1587 = vld [vmem:[%s1586] ss:$8 sm:$0x3]
    %v1589 = vlaneseq
    %v1590 = vshrl.u32 %v1589, 7
    %v1591 = vsub.s32 0, %v1590
    %v1592 = vrot.slane %v1587, %v1591
    %v1593 = vlaneseq
    %v1594 = vshrl.u32 %v1593, 7
    %v1595 = vsub.s32 1, %v1594
    %v1596 = vrot.slane %v1587, %v1595
    %1599 = vrot.lane.b32.xlu0 %v1245, 97
    %v1600 = vpop.permute.xlu0 %1599
    %1601 = vrot.lane.b32.xlu0 %v1262, 97
    %v1602 = vpop.permute.xlu0 %1601
    %1603 = vrot.lane.b32.xlu0 %v1246, 97
    %v1604 = vpop.permute.xlu0 %1603
    %vm1605 = vcmask 793600
    %v1606 = vsel %vm1605, %v1600, %v1602
    %v1607 = vsel %vm1605, %v1602, %v1604
    %v1610 = vmul.f32 %v1592, %v1606
    %v1611 = vmul.f32 %v1596, %v1607
    %v1612 = vadd.f32 %v1584, %v1610
    %v1613 = vadd.f32 %v1585, %v1611
    %s1614 = scalar_lea.vmem [#allocation7], 70
    %v1615 = vld [vmem:[%s1614] ss:$8 sm:$0x3]
    %v1617 = vlaneseq
    %v1618 = vshrl.u32 %v1617, 7
    %v1619 = vsub.s32 0, %v1618
    %v1620 = vrot.slane %v1615, %v1619
    %v1621 = vlaneseq
    %v1622 = vshrl.u32 %v1621, 7
    %v1623 = vsub.s32 1, %v1622
    %v1624 = vrot.slane %v1615, %v1623
    %1627 = vrot.lane.b32.xlu0 %v1245, 96
    %v1628 = vpop.permute.xlu0 %1627
    %1629 = vrot.lane.b32.xlu0 %v1262, 96
    %v1630 = vpop.permute.xlu0 %1629
    %1631 = vrot.lane.b32.xlu0 %v1246, 96
    %v1632 = vpop.permute.xlu0 %1631
    %vm1633 = vcmask 785408
    %v1634 = vsel %vm1633, %v1628, %v1630
    %v1635 = vsel %vm1633, %v1630, %v1632
    %v1638 = vmul.f32 %v1620, %v1634
    %v1639 = vmul.f32 %v1624, %v1635
    %v1640 = vadd.f32 %v1612, %v1638
    %v1641 = vadd.f32 %v1613, %v1639
    %s1642 = scalar_lea.vmem [#allocation7], 71
    %v1643 = vld [vmem:[%s1642] ss:$8 sm:$0x3]
    %v1645 = vlaneseq
    %v1646 = vshrl.u32 %v1645, 7
    %v1647 = vsub.s32 0, %v1646
    %v1648 = vrot.slane %v1643, %v1647
    %v1649 = vlaneseq
    %v1650 = vshrl.u32 %v1649, 7
    %v1651 = vsub.s32 1, %v1650
    %v1652 = vrot.slane %v1643, %v1651
    %1655 = vrot.lane.b32.xlu0 %v1245, 95
    %v1656 = vpop.permute.xlu0 %1655
    %1657 = vrot.lane.b32.xlu0 %v1262, 95
    %v1658 = vpop.permute.xlu0 %1657
    %1659 = vrot.lane.b32.xlu0 %v1246, 95
    %v1660 = vpop.permute.xlu0 %1659
    %vm1661 = vcmask 777216
    %v1662 = vsel %vm1661, %v1656, %v1658
    %v1663 = vsel %vm1661, %v1658, %v1660
    %v1666 = vmul.f32 %v1648, %v1662
    %v1667 = vmul.f32 %v1652, %v1663
    %v1668 = vadd.f32 %v1640, %v1666
    %v1669 = vadd.f32 %v1641, %v1667
    %s1670 = scalar_lea.vmem [#allocation7], 80
    %v1671 = vld [vmem:[%s1670] ss:$8 sm:$0x3]
    %v1673 = vlaneseq
    %v1674 = vshrl.u32 %v1673, 7
    %v1675 = vsub.s32 0, %v1674
    %v1676 = vrot.slane %v1671, %v1675
    %v1677 = vlaneseq
    %v1678 = vshrl.u32 %v1677, 7
    %v1679 = vsub.s32 1, %v1678
    %v1680 = vrot.slane %v1671, %v1679
    %1683 = vrot.lane.b32.xlu0 %v1245, 94
    %v1684 = vpop.permute.xlu0 %1683
    %1685 = vrot.lane.b32.xlu0 %v1262, 94
    %v1686 = vpop.permute.xlu0 %1685
    %1687 = vrot.lane.b32.xlu0 %v1246, 94
    %v1688 = vpop.permute.xlu0 %1687
    %vm1689 = vcmask 769024
    %v1690 = vsel %vm1689, %v1684, %v1686
    %v1691 = vsel %vm1689, %v1686, %v1688
    %v1694 = vmul.f32 %v1676, %v1690
    %v1695 = vmul.f32 %v1680, %v1691
    %v1696 = vadd.f32 %v1668, %v1694
    %v1697 = vadd.f32 %v1669, %v1695
    %s1698 = scalar_lea.vmem [#allocation7], 81
    %v1699 = vld [vmem:[%s1698] ss:$8 sm:$0x3]
    %v1701 = vlaneseq
    %v1702 = vshrl.u32 %v1701, 7
    %v1703 = vsub.s32 0, %v1702
    %v1704 = vrot.slane %v1699, %v1703
    %v1705 = vlaneseq
    %v1706 = vshrl.u32 %v1705, 7
    %v1707 = vsub.s32 1, %v1706
    %v1708 = vrot.slane %v1699, %v1707
    %1711 = vrot.lane.b32.xlu0 %v1245, 93
    %v1712 = vpop.permute.xlu0 %1711
    %1713 = vrot.lane.b32.xlu0 %v1262, 93
    %v1714 = vpop.permute.xlu0 %1713
    %1715 = vrot.lane.b32.xlu0 %v1246, 93
    %v1716 = vpop.permute.xlu0 %1715
    %vm1717 = vcmask 760832
    %v1718 = vsel %vm1717, %v1712, %v1714
    %v1719 = vsel %vm1717, %v1714, %v1716
    %v1722 = vmul.f32 %v1704, %v1718
    %v1723 = vmul.f32 %v1708, %v1719
    %v1724 = vadd.f32 %v1696, %v1722
    %v1725 = vadd.f32 %v1697, %v1723
    %s1726 = scalar_lea.vmem [#allocation7], 82
    %v1727 = vld [vmem:[%s1726] ss:$8 sm:$0x3]
    %v1729 = vlaneseq
    %v1730 = vshrl.u32 %v1729, 7
    %v1731 = vsub.s32 0, %v1730
    %v1732 = vrot.slane %v1727, %v1731
    %v1733 = vlaneseq
    %v1734 = vshrl.u32 %v1733, 7
    %v1735 = vsub.s32 1, %v1734
    %v1736 = vrot.slane %v1727, %v1735
    %1739 = vrot.lane.b32.xlu0 %v1245, 83
    %v1740 = vpop.permute.xlu0 %1739
    %1741 = vrot.lane.b32.xlu0 %v1262, 83
    %v1742 = vpop.permute.xlu0 %1741
    %1743 = vrot.lane.b32.xlu0 %v1246, 83
    %v1744 = vpop.permute.xlu0 %1743
    %vm1745 = vcmask 678912
    %v1746 = vsel %vm1745, %v1740, %v1742
    %v1747 = vsel %vm1745, %v1742, %v1744
    %v1750 = vmul.f32 %v1732, %v1746
    %v1751 = vmul.f32 %v1736, %v1747
    %v1752 = vadd.f32 %v1724, %v1750
    %v1753 = vadd.f32 %v1725, %v1751
    %s1754 = scalar_lea.vmem [#allocation7], 83
    %v1755 = vld [vmem:[%s1754] ss:$8 sm:$0x3]
    %v1757 = vlaneseq
    %v1758 = vshrl.u32 %v1757, 7
    %v1759 = vsub.s32 0, %v1758
    %v1760 = vrot.slane %v1755, %v1759
    %v1761 = vlaneseq
    %v1762 = vshrl.u32 %v1761, 7
    %v1763 = vsub.s32 1, %v1762
    %v1764 = vrot.slane %v1755, %v1763
    %1767 = vrot.lane.b32.xlu0 %v1245, 82
    %v1768 = vpop.permute.xlu0 %1767
    %1769 = vrot.lane.b32.xlu0 %v1262, 82
    %v1770 = vpop.permute.xlu0 %1769
    %1771 = vrot.lane.b32.xlu0 %v1246, 82
    %v1772 = vpop.permute.xlu0 %1771
    %vm1773 = vcmask 670720
    %v1774 = vsel %vm1773, %v1768, %v1770
    %v1775 = vsel %vm1773, %v1770, %v1772
    %v1778 = vmul.f32 %v1760, %v1774
    %v1779 = vmul.f32 %v1764, %v1775
    %v1780 = vadd.f32 %v1752, %v1778
    %v1781 = vadd.f32 %v1753, %v1779
    %s1782 = scalar_lea.vmem [#allocation7], 84
    %v1783 = vld [vmem:[%s1782] ss:$8 sm:$0x3]
    %v1785 = vlaneseq
    %v1786 = vshrl.u32 %v1785, 7
    %v1787 = vsub.s32 0, %v1786
    %v1788 = vrot.slane %v1783, %v1787
    %v1789 = vlaneseq
    %v1790 = vshrl.u32 %v1789, 7
    %v1791 = vsub.s32 1, %v1790
    %v1792 = vrot.slane %v1783, %v1791
    %1795 = vrot.lane.b32.xlu0 %v1245, 81
    %v1796 = vpop.permute.xlu0 %1795
    %1797 = vrot.lane.b32.xlu0 %v1262, 81
    %v1798 = vpop.permute.xlu0 %1797
    %1799 = vrot.lane.b32.xlu0 %v1246, 81
    %v1800 = vpop.permute.xlu0 %1799
    %vm1801 = vcmask 662528
    %v1802 = vsel %vm1801, %v1796, %v1798
    %v1803 = vsel %vm1801, %v1798, %v1800
    %v1806 = vmul.f32 %v1788, %v1802
    %v1807 = vmul.f32 %v1792, %v1803
    %v1808 = vadd.f32 %v1780, %v1806
    %v1809 = vadd.f32 %v1781, %v1807
    %s1810 = scalar_lea.vmem [#allocation7], 85
    %v1811 = vld [vmem:[%s1810] ss:$8 sm:$0x3]
    %v1813 = vlaneseq
    %v1814 = vshrl.u32 %v1813, 7
    %v1815 = vsub.s32 0, %v1814
    %v1816 = vrot.slane %v1811, %v1815
    %v1817 = vlaneseq
    %v1818 = vshrl.u32 %v1817, 7
    %v1819 = vsub.s32 1, %v1818
    %v1820 = vrot.slane %v1811, %v1819
    %1823 = vrot.lane.b32.xlu0 %v1245, 80
    %v1824 = vpop.permute.xlu0 %1823
    %1825 = vrot.lane.b32.xlu0 %v1262, 80
    %v1826 = vpop.permute.xlu0 %1825
    %1827 = vrot.lane.b32.xlu0 %v1246, 80
    %v1828 = vpop.permute.xlu0 %1827
    %vm1829 = vcmask 654336
    %v1830 = vsel %vm1829, %v1824, %v1826
    %v1831 = vsel %vm1829, %v1826, %v1828
    %v1834 = vmul.f32 %v1816, %v1830
    %v1835 = vmul.f32 %v1820, %v1831
    %v1836 = vadd.f32 %v1808, %v1834
    %v1837 = vadd.f32 %v1809, %v1835
    %s1838 = scalar_lea.vmem [#allocation7], 86
    %v1839 = vld [vmem:[%s1838] ss:$8 sm:$0x3]
    %v1841 = vlaneseq
    %v1842 = vshrl.u32 %v1841, 7
    %v1843 = vsub.s32 0, %v1842
    %v1844 = vrot.slane %v1839, %v1843
    %v1845 = vlaneseq
    %v1846 = vshrl.u32 %v1845, 7
    %v1847 = vsub.s32 1, %v1846
    %v1848 = vrot.slane %v1839, %v1847
    %1851 = vrot.lane.b32.xlu0 %v1245, 79
    %v1852 = vpop.permute.xlu0 %1851
    %1853 = vrot.lane.b32.xlu0 %v1262, 79
    %v1854 = vpop.permute.xlu0 %1853
    %1855 = vrot.lane.b32.xlu0 %v1246, 79
    %v1856 = vpop.permute.xlu0 %1855
    %vm1857 = vcmask 646144
    %v1858 = vsel %vm1857, %v1852, %v1854
    %v1859 = vsel %vm1857, %v1854, %v1856
    %v1862 = vmul.f32 %v1844, %v1858
    %v1863 = vmul.f32 %v1848, %v1859
    %v1864 = vadd.f32 %v1836, %v1862
    %v1865 = vadd.f32 %v1837, %v1863
    %s1866 = scalar_lea.vmem [#allocation7], 87
    %v1867 = vld [vmem:[%s1866] ss:$8 sm:$0x3]
    %v1869 = vlaneseq
    %v1870 = vshrl.u32 %v1869, 7
    %v1871 = vsub.s32 0, %v1870
    %v1872 = vrot.slane %v1867, %v1871
    %v1873 = vlaneseq
    %v1874 = vshrl.u32 %v1873, 7
    %v1875 = vsub.s32 1, %v1874
    %v1876 = vrot.slane %v1867, %v1875
    %1879 = vrot.lane.b32.xlu0 %v1245, 78
    %v1880 = vpop.permute.xlu0 %1879
    %1881 = vrot.lane.b32.xlu0 %v1262, 78
    %v1882 = vpop.permute.xlu0 %1881
    %1883 = vrot.lane.b32.xlu0 %v1246, 78
    %v1884 = vpop.permute.xlu0 %1883
    %vm1885 = vcmask 637952
    %v1886 = vsel %vm1885, %v1880, %v1882
    %v1887 = vsel %vm1885, %v1882, %v1884
    %v1890 = vmul.f32 %v1872, %v1886
    %v1891 = vmul.f32 %v1876, %v1887
    %v1892 = vadd.f32 %v1864, %v1890
    %v1893 = vadd.f32 %v1865, %v1891
    %s1894 = scalar_lea.vmem [#allocation7], 96
    %v1895 = vld [vmem:[%s1894] ss:$8 sm:$0x3]
    %v1897 = vlaneseq
    %v1898 = vshrl.u32 %v1897, 7
    %v1899 = vsub.s32 0, %v1898
    %v1900 = vrot.slane %v1895, %v1899
    %v1901 = vlaneseq
    %v1902 = vshrl.u32 %v1901, 7
    %v1903 = vsub.s32 1, %v1902
    %v1904 = vrot.slane %v1895, %v1903
    %1907 = vrot.lane.b32.xlu0 %v1245, 77
    %v1908 = vpop.permute.xlu0 %1907
    %1909 = vrot.lane.b32.xlu0 %v1262, 77
    %v1910 = vpop.permute.xlu0 %1909
    %1911 = vrot.lane.b32.xlu0 %v1246, 77
    %v1912 = vpop.permute.xlu0 %1911
    %vm1913 = vcmask 629760
    %v1914 = vsel %vm1913, %v1908, %v1910
    %v1915 = vsel %vm1913, %v1910, %v1912
    %v1918 = vmul.f32 %v1900, %v1914
    %v1919 = vmul.f32 %v1904, %v1915
    %v1920 = vadd.f32 %v1892, %v1918
    %v1921 = vadd.f32 %v1893, %v1919
    %v1922 = vxor.u32 %v1920, 2147483648
    %v1923 = vxor.u32 %v1921, 2147483648
    %v1924 = vmul.f32 %v1922, 1.442695
    %v1925 = vpow.pop %v1924
    %v1926 = vmul.f32 %v1923, 1.442695
    %v1927 = vpow.pop %v1926
    %v1928 = vadd.f32 %v1925, 1.0
    %v1929 = vadd.f32 %v1927, 1.0
    %v1930 = vrcp.pop %v1928
    %v1931 = vmul.f32 1.0, %v1930
    %v1932 = vrcp.pop %v1929
    %v1933 = vmul.f32 1.0, %v1932
    %v1934 = vld [vmem:[#allocation4] sm:$0xff]
    %v1935 = vld [vmem:[#allocation4 + $0x8] sm:$0xff]
    %v1936 = vld [vmem:[#allocation4 + $0x10] sm:$0xff]
    %v1937 = vld [vmem:[#allocation4 + $0x18] sm:$0xff]
    %v1938 = vld [vmem:[#allocation4 + $0x20] sm:$0xff]
    %v1939 = vld [vmem:[#allocation4 + $0x28] sm:$0xff]
    %v1940 = vld [vmem:[#allocation4 + $0x30] sm:$0xff]
    %v1941 = vld [vmem:[#allocation4 + $0x38] sm:$0xff]
    %v1942 = vld [vmem:[#allocation4 + $0x40] sm:$0xff]
    %v1943 = vld [vmem:[#allocation4 + $0x48] sm:$0xff]
    %v1944 = vld [vmem:[#allocation4 + $0x50] sm:$0xff]
    %v1945 = vld [vmem:[#allocation4 + $0x58] sm:$0xff]
    %v1946 = vld [vmem:[#allocation4 + $0x60] sm:$0xff]
    %v1947 = vld [vmem:[#allocation4 + $0x68] sm:$0xff]
    %v1948 = vld [vmem:[#allocation4 + $0x70] sm:$0xff]
    %v1949 = vld [vmem:[#allocation4 + $0x78] sm:$0xff]
    %v1950 = vld [vmem:[#allocation4 + $0x80] sm:$0xff]
    %v1951 = vld [vmem:[#allocation4 + $0x88] sm:$0xff]
    %v1952 = vld [vmem:[#allocation4 + $0x90] sm:$0xff]
    %v1953 = vld [vmem:[#allocation4 + $0x98] sm:$0xff]
    %v1954 = vld [vmem:[#allocation4 + $0xa0] sm:$0xff]
    %v1955 = vld [vmem:[#allocation4 + $0xa8] sm:$0xff]
    %v1956 = vld [vmem:[#allocation4 + $0xb0] sm:$0xff]
    %v1957 = vld [vmem:[#allocation4 + $0xb8] sm:$0xff]
    %v1958 = vld [vmem:[#allocation4 + $0xc0] sm:$0xff]
    %v1959 = vld [vmem:[#allocation4 + $0xc8] sm:$0xff]
    %v1960 = vld [vmem:[#allocation4 + $0xd0] sm:$0xff]
    %v1961 = vld [vmem:[#allocation4 + $0xd8] sm:$0xff]
    %v1962 = vld [vmem:[#allocation4 + $0xe0] sm:$0xff]
    %v1963 = vld [vmem:[#allocation4 + $0xe8] sm:$0xff]
    %v1964 = vld [vmem:[#allocation4 + $0xf0] sm:$0xff]
    %v1965 = vld [vmem:[#allocation4 + $0xf8] sm:$0xff]
    %v1968 = vcombine.low %v1931, %v1933
    %v1970 = vunpack.c.l.s4 1966171168
    %v1971 = vunpack.c.0.s8 %v1970
    %v1972 = vlaneseq
    %v1973 = vshrl.u32 %v1972, 7
    %v1974 = vsub.s32 %v1971, %v1973
    %v1975 = vrot.slane %v1968, %v1974
    %v1976 = vcombine.high %v1975, %v1975
    %v1978 = vunpack.c.l.s4 1966171168
    %v1979 = vunpack.c.0.s8 %v1978
    %v1980 = vlaneseq
    %v1981 = vshrl.u32 %v1980, 7
    %v1982 = vsub.s32 %v1979, %v1981
    %v1983 = vrot.slane %v1975, %v1982
    %v1985 = vunpack.c.l.s4 1966171168
    %v1986 = vunpack.c.0.s8 %v1985
    %v1987 = vlaneseq
    %v1988 = vshrl.u32 %v1987, 7
    %v1989 = vsub.s32 %v1986, %v1988
    %v1990 = vrot.slane %v1976, %v1989
    %v1991 = vcombine.high %v1983, %v1983
    %v1992 = vcombine.high %v1990, %v1990
    %v1993 = vlaneseq
    %v1994 = vshrl.u32 %v1993, 7
    %v1995 = vsub.s32 0, %v1994
    %v1996 = vrot.slane %v1983, %v1995
    %v1997 = vlaneseq
    %v1998 = vshrl.u32 %v1997, 7
    %v1999 = vsub.s32 1, %v1998
    %v2000 = vrot.slane %v1983, %v1999
    %v2001 = vlaneseq
    %v2002 = vshrl.u32 %v2001, 7
    %v2003 = vsub.s32 0, %v2002
    %v2004 = vrot.slane %v1990, %v2003
    %v2005 = vlaneseq
    %v2006 = vshrl.u32 %v2005, 7
    %v2007 = vsub.s32 1, %v2006
    %v2008 = vrot.slane %v1990, %v2007
    %v2009 = vlaneseq
    %v2010 = vshrl.u32 %v2009, 7
    %v2011 = vsub.s32 0, %v2010
    %v2012 = vrot.slane %v1991, %v2011
    %v2013 = vlaneseq
    %v2014 = vshrl.u32 %v2013, 7
    %v2015 = vsub.s32 1, %v2014
    %v2016 = vrot.slane %v1991, %v2015
    %v2017 = vlaneseq
    %v2018 = vshrl.u32 %v2017, 7
    %v2019 = vsub.s32 0, %v2018
    %v2020 = vrot.slane %v1992, %v2019
    %v2021 = vlaneseq
    %v2022 = vshrl.u32 %v2021, 7
    %v2023 = vsub.s32 1, %v2022
    %v2024 = vrot.slane %v1992, %v2023
    %v2033 = vmul.f32 %v1934, %v1996
    %v2034 = vmul.f32 %v1935, %v2000
    %v2035 = vmul.f32 %v1936, %v1996
    %v2036 = vmul.f32 %v1937, %v2000
    %v2037 = vmul.f32 %v1938, %v1996
    %v2038 = vmul.f32 %v1939, %v2000
    %v2039 = vmul.f32 %v1940, %v1996
    %v2040 = vmul.f32 %v1941, %v2000
    %v2041 = vmul.f32 %v1942, %v2004
    %v2042 = vmul.f32 %v1943, %v2008
    %v2043 = vmul.f32 %v1944, %v2004
    %v2044 = vmul.f32 %v1945, %v2008
    %v2045 = vmul.f32 %v1946, %v2004
    %v2046 = vmul.f32 %v1947, %v2008
    %v2047 = vmul.f32 %v1948, %v2004
    %v2048 = vmul.f32 %v1949, %v2008
    %v2049 = vmul.f32 %v1950, %v2012
    %v2050 = vmul.f32 %v1951, %v2016
    %v2051 = vmul.f32 %v1952, %v2012
    %v2052 = vmul.f32 %v1953, %v2016
    %v2053 = vmul.f32 %v1954, %v2012
    %v2054 = vmul.f32 %v1955, %v2016
    %v2055 = vmul.f32 %v1956, %v2012
    %v2056 = vmul.f32 %v1957, %v2016
    %v2057 = vmul.f32 %v1958, %v2020
    %v2058 = vmul.f32 %v1959, %v2024
    %v2059 = vmul.f32 %v1960, %v2020
    %v2060 = vmul.f32 %v1961, %v2024
    %v2061 = vmul.f32 %v1962, %v2020
    %v2062 = vmul.f32 %v1963, %v2024
    %v2063 = vmul.f32 %v1964, %v2020
    %v2064 = vmul.f32 %v1965, %v2024
    %v2065 = vlaneseq
    %v2066 = vshrl.u32 %v2065, 7
    %v2067 = vsub.s32 0, %v2066
    %v2068 = vrot.slane %v519, %v2067
    %2070 = vbcast.lane.b32.xlu0 %v2068, 256
    %v2071 = vpop.permute.xlu0 %2070
    %s2073 = sor.u32 256, 8
    %2074 = vbcast.lane.b32.xlu0 %v2068, %s2073
    %v2075 = vpop.permute.xlu0 %2074
    %s2077 = sor.u32 256, 16
    %2078 = vbcast.lane.b32.xlu0 %v2068, %s2077
    %v2079 = vpop.permute.xlu0 %2078
    %s2081 = sor.u32 256, 24
    %2082 = vbcast.lane.b32.xlu0 %v2068, %s2081
    %v2083 = vpop.permute.xlu0 %2082
    %v2084 = vlaneseq
    %v2085 = vshrl.u32 %v2084, 7
    %v2086 = vsub.s32 1, %v2085
    %v2087 = vrot.slane %v519, %v2086
    %2089 = vbcast.lane.b32.xlu0 %v2087, 256
    %v2090 = vpop.permute.xlu0 %2089
    %s2092 = sor.u32 256, 8
    %2093 = vbcast.lane.b32.xlu0 %v2087, %s2092
    %v2094 = vpop.permute.xlu0 %2093
    %s2096 = sor.u32 256, 16
    %2097 = vbcast.lane.b32.xlu0 %v2087, %s2096
    %v2098 = vpop.permute.xlu0 %2097
    %s2100 = sor.u32 256, 24
    %2101 = vbcast.lane.b32.xlu0 %v2087, %s2100
    %v2102 = vpop.permute.xlu0 %2101
    %v2103 = vlaneseq
    %v2104 = vshrl.u32 %v2103, 7
    %v2105 = vsub.s32 2, %v2104
    %v2106 = vrot.slane %v519, %v2105
    %2108 = vbcast.lane.b32.xlu0 %v2106, 256
    %v2109 = vpop.permute.xlu0 %2108
    %s2111 = sor.u32 256, 8
    %2112 = vbcast.lane.b32.xlu0 %v2106, %s2111
    %v2113 = vpop.permute.xlu0 %2112
    %s2115 = sor.u32 256, 16
    %2116 = vbcast.lane.b32.xlu0 %v2106, %s2115
    %v2117 = vpop.permute.xlu0 %2116
    %s2119 = sor.u32 256, 24
    %2120 = vbcast.lane.b32.xlu0 %v2106, %s2119
    %v2121 = vpop.permute.xlu0 %2120
    %v2122 = vlaneseq
    %v2123 = vshrl.u32 %v2122, 7
    %v2124 = vsub.s32 3, %v2123
    %v2125 = vrot.slane %v519, %v2124
    %2127 = vbcast.lane.b32.xlu0 %v2125, 256
    %v2128 = vpop.permute.xlu0 %2127
    %s2130 = sor.u32 256, 8
    %2131 = vbcast.lane.b32.xlu0 %v2125, %s2130
    %v2132 = vpop.permute.xlu0 %2131
    %s2134 = sor.u32 256, 16
    %2135 = vbcast.lane.b32.xlu0 %v2125, %s2134
    %v2136 = vpop.permute.xlu0 %2135
    %s2138 = sor.u32 256, 24
    %2139 = vbcast.lane.b32.xlu0 %v2125, %s2138
    %v2140 = vpop.permute.xlu0 %2139
    %v2141 = vmul.f32 %v2033, %v2071
    %v2142 = vmul.f32 %v2034, %v2071
    %v2143 = vmul.f32 %v2035, %v2075
    %v2144 = vmul.f32 %v2036, %v2075
    %v2145 = vmul.f32 %v2037, %v2079
    %v2146 = vmul.f32 %v2038, %v2079
    %v2147 = vmul.f32 %v2039, %v2083
    %v2148 = vmul.f32 %v2040, %v2083
    %v2149 = vmul.f32 %v2041, %v2090
    %v2150 = vmul.f32 %v2042, %v2090
    %v2151 = vmul.f32 %v2043, %v2094
    %v2152 = vmul.f32 %v2044, %v2094
    %v2153 = vmul.f32 %v2045, %v2098
    %v2154 = vmul.f32 %v2046, %v2098
    %v2155 = vmul.f32 %v2047, %v2102
    %v2156 = vmul.f32 %v2048, %v2102
    %v2157 = vmul.f32 %v2049, %v2109
    %v2158 = vmul.f32 %v2050, %v2109
    %v2159 = vmul.f32 %v2051, %v2113
    %v2160 = vmul.f32 %v2052, %v2113
    %v2161 = vmul.f32 %v2053, %v2117
    %v2162 = vmul.f32 %v2054, %v2117
    %v2163 = vmul.f32 %v2055, %v2121
    %v2164 = vmul.f32 %v2056, %v2121
    %v2165 = vmul.f32 %v2057, %v2128
    %v2166 = vmul.f32 %v2058, %v2128
    %v2167 = vmul.f32 %v2059, %v2132
    %v2168 = vmul.f32 %v2060, %v2132
    %v2169 = vmul.f32 %v2061, %v2136
    %v2170 = vmul.f32 %v2062, %v2136
    %v2171 = vmul.f32 %v2063, %v2140
    %v2172 = vmul.f32 %v2064, %v2140
    %2173 = vst [vmem:[#allocation9] sm:$0xff] %v2141
    %2174 = vst [vmem:[#allocation9 + $0x8] sm:$0xff] %v2142
    %2175 = vst [vmem:[#allocation9 + $0x10] sm:$0xff] %v2143
    %2176 = vst [vmem:[#allocation9 + $0x18] sm:$0xff] %v2144
    %2177 = vst [vmem:[#allocation9 + $0x20] sm:$0xff] %v2145
    %2178 = vst [vmem:[#allocation9 + $0x28] sm:$0xff] %v2146
    %2179 = vst [vmem:[#allocation9 + $0x30] sm:$0xff] %v2147
    %2180 = vst [vmem:[#allocation9 + $0x38] sm:$0xff] %v2148
    %2181 = vst [vmem:[#allocation9 + $0x40] sm:$0xff] %v2149
    %2182 = vst [vmem:[#allocation9 + $0x48] sm:$0xff] %v2150
    %2183 = vst [vmem:[#allocation9 + $0x50] sm:$0xff] %v2151
    %2184 = vst [vmem:[#allocation9 + $0x58] sm:$0xff] %v2152
    %2185 = vst [vmem:[#allocation9 + $0x60] sm:$0xff] %v2153
    %2186 = vst [vmem:[#allocation9 + $0x68] sm:$0xff] %v2154
    %2187 = vst [vmem:[#allocation9 + $0x70] sm:$0xff] %v2155
    %2188 = vst [vmem:[#allocation9 + $0x78] sm:$0xff] %v2156
    %2189 = vst [vmem:[#allocation9 + $0x80] sm:$0xff] %v2157
    %2190 = vst [vmem:[#allocation9 + $0x88] sm:$0xff] %v2158
    %2191 = vst [vmem:[#allocation9 + $0x90] sm:$0xff] %v2159
    %2192 = vst [vmem:[#allocation9 + $0x98] sm:$0xff] %v2160
    %2193 = vst [vmem:[#allocation9 + $0xa0] sm:$0xff] %v2161
    %2194 = vst [vmem:[#allocation9 + $0xa8] sm:$0xff] %v2162
    %2195 = vst [vmem:[#allocation9 + $0xb0] sm:$0xff] %v2163
    %2196 = vst [vmem:[#allocation9 + $0xb8] sm:$0xff] %v2164
    %2197 = vst [vmem:[#allocation9 + $0xc0] sm:$0xff] %v2165
    %2198 = vst [vmem:[#allocation9 + $0xc8] sm:$0xff] %v2166
    %2199 = vst [vmem:[#allocation9 + $0xd0] sm:$0xff] %v2167
    %2200 = vst [vmem:[#allocation9 + $0xd8] sm:$0xff] %v2168
    %2201 = vst [vmem:[#allocation9 + $0xe0] sm:$0xff] %v2169
    %2202 = vst [vmem:[#allocation9 + $0xe8] sm:$0xff] %v2170
    %2203 = vst [vmem:[#allocation9 + $0xf0] sm:$0xff] %v2171
    %2204 = vst [vmem:[#allocation9 + $0xf8] sm:$0xff] %v2172
    // Predicated region
    $region42: #{tpu_custom_call.1} parent=1 // pred_check
      _
    $region43: #{tpu_custom_call.1} parent=1 // pred_check_branch
      %2206 = sbr.rel (0) target = $region45
    $region44: #{tpu_custom_call.1} parent=1 // pred_region
      %s2208 = ssub.s32 4096, 4096
      %2209 = vsyncadd [#allocation6], %s2208
      %s2210 = sshll.u32 [#allocation9], 4
      %s2211 = int_to_ptr.vmem [resolvable:$true] %s2210
      %2216 = dma.vmem_to_hbm [thread:$0]  %s2211, 4096, %s8, [#allocation6], 256, 256, 16
    $region45: #{tpu_custom_call.1} parent=1 // pred_fallthru
      _
    // Predicated region
    $region46: #{tpu_custom_call.1} parent=1 // pred_check
      _
    $region47: #{tpu_custom_call.1} parent=1 // pred_check_branch
      %2218 = sbr.rel (0) target = $region49
    $region48: #{tpu_custom_call.1} parent=1 // pred_region
      %2219 = dma.done [#allocation6], 4096
    $region49: #{tpu_custom_call.1} parent=1 // pred_fallthru
      _
    %2220 = vsyncpa [#allocation5], 1
    %2221 = vsyncpa [#allocation8], 1
    %2222 = vsyncpa [#allocation6], 1

</llo_original>
